<compile_context>
chip_gen: v7x
topology: tpu7x:2x2x1
jax: 0.10.0
libtpu: 0.0.40
codegen_flags: <defaults>
</compile_context>

<pallas_src>
import jax
import jax.numpy as jnp
from jax.experimental import pallas as pl
from jax.experimental.pallas import tpu as pltpu

# "NT" contraction: contract the last dim of both operands -> (M_lhs, M_rhs).
_NT_DIMS = (((1,), (1,)), ((), ()))


# ----------------------------------------------------------------------------
# Kernels
# ----------------------------------------------------------------------------
def _mlp_hidden(x_ref, w1_ref, b1_ref, w2_ref, b2_ref):
    """Two Linear+ReLU layers. bf16 MXU inputs, f32 accumulation/activations."""
    x = x_ref[...].astype(w1_ref.dtype)                               # bf16 (TB, dim_in)
    h = jnp.dot(x, w1_ref[...], preferred_element_type=jnp.float32) + b1_ref[...]
    h = jnp.maximum(h, 0.0)                                           # f32 (TB, h1)
    h = jnp.dot(h.astype(w2_ref.dtype), w2_ref[...],
                preferred_element_type=jnp.float32) + b2_ref[...]
    h = jnp.maximum(h, 0.0)                                           # f32 (TB, h2)
    return h


def _row_dot_to_lanes(lhs_row, mat):
    """sum_j lhs_row[0, j] * mat[i, j]  ->  (1, TB) lane-dense row (MXU NT matmul)."""
    return jax.lax.dot_general(lhs_row, mat, _NT_DIMS,
                               preferred_element_type=jnp.float32)


def _disc_kernel_uncond(x_ref, w1_ref, b1_ref, w2_ref, b2_ref,
                        wo_ref, bo_ref, out_ref):
    h = _mlp_hidden(x_ref, w1_ref, b1_ref, w2_ref, b2_ref)
    # Output head: w_out (single column) against h, produced lane-dense.
    out_ref[...] = _row_dot_to_lanes(wo_ref[...], h) + bo_ref[0, 0]   # (1, TB)


def _disc_kernel_cond(x_ref, y_ref, w1_ref, b1_ref, w2_ref, b2_ref,
                      wo_ref, emb_ref, bo_ref, out_ref):
    h = _mlp_hidden(x_ref, w1_ref, b1_ref, w2_ref, b2_ref)

    # In-kernel argmax(y) -> one-hot (first-occurrence tie-break, torch semantics).
    y = y_ref[...]                                                    # f32 (TB, C)
    num_classes = y.shape[1]
    colf = jax.lax.broadcasted_iota(jnp.int32, y.shape, 1).astype(jnp.float32)
    row_max = jnp.max(y, axis=1, keepdims=True)                       # (TB, 1)
    idx = jnp.min(jnp.where(y == row_max, colf, float(num_classes)),
                  axis=1, keepdims=True)                              # (TB, 1)
    onehot = (colf == idx).astype(jnp.float32)                        # (TB, C)

    # Embedding lookup as one-hot @ table (one tiny MXU pass, f32 exact).
    embed_y = jnp.dot(onehot, emb_ref[...],
                      preferred_element_type=jnp.float32)             # (TB, h2)

    # Fused output head + class projection:
    #   out[i] = sum_j h[i,j] * (w_out[j] + embed_y[i,j]) + b_out
    p = h * (wo_ref[...] + embed_y)                                   # (TB, h2)
    ones_row = jnp.ones((1, p.shape[1]), jnp.float32)
    out_ref[...] = _row_dot_to_lanes(ones_row, p) + bo_ref[0, 0]      # (1, TB)


# ----------------------------------------------------------------------------
# Wrapper
# ----------------------------------------------------------------------------
def discriminator_forward(params, x, y=None):
    """Fused discriminator forward pass, batch-tiled Pallas kernel."""
    B, dim_in = x.shape
    h1 = params["w1"].shape[1]
    h2 = params["w2"].shape[1]
    dim_class = params["embedding"].shape[0]

    # Single tile for small batches (no padding / ragged blocks at all);
    # 512-row tiles otherwise (lane/sublane aligned, >=2 parallel grid steps so
    # the v7x megacore can shard the batch axis; ragged last block is handled
    # by Pallas masked writes).
    tb = B if B <= 1024 else 512
    nb = pl.cdiv(B, tb)

    # Parameter-sized dtype prep (negligible; batch tensors are untouched).
    w1 = params["w1"].astype(jnp.bfloat16)
    w2 = params["w2"].astype(jnp.bfloat16)
    b1 = params["b1"].astype(jnp.float32)
    b2 = params["b2"].astype(jnp.float32)
    wo_row = params["w_out"].astype(jnp.float32).T                    # (1, h2)
    bo = params["b_out"].astype(jnp.float32)                          # (1, 1) -> SMEM

    def resident(shape):
        # Constant index_map: fetched once, stays VMEM-resident across the grid.
        return pl.BlockSpec(shape, lambda i: (0, 0))

    x_spec = pl.BlockSpec((tb, dim_in), lambda i: (i, 0))
    out_spec = pl.BlockSpec((1, tb), lambda i: (0, i))                # lane-dense output
    weight_specs = [resident((dim_in, h1)), resident((1, h1)),
                    resident((h1, h2)), resident((1, h2)),
                    resident((1, h2))]
    smem_spec = pl.BlockSpec(memory_space=pltpu.MemorySpace.SMEM)

    cparams = pltpu.CompilerParams(
        dimension_semantics=("parallel",),        # megacore sharding on v7x
        vmem_limit_bytes=32 * 1024 * 1024,        # explicit budget, safe on 64 MiB v7x
    )
    out_shape = jax.ShapeDtypeStruct((1, B), jnp.float32)

    if y is None:
        out = pl.pallas_call(
            _disc_kernel_uncond,
            grid=(nb,),
            in_specs=[x_spec] + weight_specs + [smem_spec],
            out_specs=out_spec,
            out_shape=out_shape,
            compiler_params=cparams,
        )(x, w1, b1, w2, b2, wo_row, bo)
    else:
        y_spec = pl.BlockSpec((tb, dim_class), lambda i: (i, 0))
        emb_spec = resident((dim_class, h2))
        out = pl.pallas_call(
            _disc_kernel_cond,
            grid=(nb,),
            in_specs=[x_spec, y_spec] + weight_specs + [emb_spec, smem_spec],
            out_specs=out_spec,
            out_shape=out_shape,
            compiler_params=cparams,
        )(x, y, w1, b1, w2, b2, wo_row,
          params["embedding"].astype(jnp.float32), bo)

    # (1, B) and (B, 1) share the same row-major memory layout: this reshape is free.
    return out.reshape(B, 1)


# ----------------------------------------------------------------------------
# Deterministic parameter construction (xavier-uniform, matching __init__ shapes)
# ----------------------------------------------------------------------------
def _xavier_uniform(key, fan_in, fan_out, gain=1.0):
    bound = gain * jnp.sqrt(6.0 / (fan_in + fan_out))
    return jax.random.uniform(key, (fan_in, fan_out), jnp.float32, -bound, bound)


def make_params(key, dim_in, dim_class, hiddens):
    keys = jax.random.split(key, 4)
    h1, h2 = hiddens
    return {
        "w1": _xavier_uniform(keys[0], dim_in, h1, gain=1.0),
        "b1": jnp.zeros((1, h1), jnp.float32),
        "w2": _xavier_uniform(keys[1], h1, h2, gain=1.0),
        "b2": jnp.zeros((1, h2), jnp.float32),
        "w_out": _xavier_uniform(keys[2], h2, 1, gain=1.0),
        "b_out": jnp.zeros((1, 1), jnp.float32),
        # nn.Embedding(dim_class, prev_layer_size) -> table (dim_class, h2)
        "embedding": jax.random.normal(keys[3], (dim_class, h2), jnp.float32),
    }


# ----------------------------------------------------------------------------
# Pure-JAX reference (mirrors the kernel's bf16-matmul / f32-accumulate path)
# ----------------------------------------------------------------------------
def reference_forward(params, x, y=None, compute_dtype=jnp.bfloat16):
    w1 = params["w1"].astype(compute_dtype)
    w2 = params["w2"].astype(compute_dtype)
    h = jnp.maximum(jnp.dot(x.astype(compute_dtype), w1,
                            preferred_element_type=jnp.float32) + params["b1"], 0.0)
    h = jnp.maximum(jnp.dot(h.astype(compute_dtype), w2,
                            preferred_element_type=jnp.float32) + params["b2"], 0.0)
    out = h @ params["w_out"] + params["b_out"]
    if y is not None:
        idx = jnp.argmax(y, axis=1)
        embed_y = params["embedding"][idx]
        out = out + jnp.sum(embed_y * h, axis=1, keepdims=True)
    return out


if __name__ == "__main__":
    # Small shapes consistent with the module's forward:
    #   x: (batch, dim_in), y: one-hot (batch, dim_class)
    # B=250 -> single ragged-free tile (block dims equal the full array dims).
    B, DIM_IN, DIM_CLASS = 250, 16, 4
    HIDDENS = [32, 32]

    key = jax.random.PRNGKey(0)
    k_param, k_x, k_y = jax.random.split(key, 3)

    params = make_params(k_param, DIM_IN, DIM_CLASS, HIDDENS)
    x = jax.random.normal(k_x, (B, DIM_IN), jnp.float32)
    labels = jax.random.randint(k_y, (B,), 0, DIM_CLASS)
    y = jax.nn.one_hot(labels, DIM_CLASS, dtype=jnp.float32)

    # Conditional path (x, y) and unconditional path (x only), as in the module.
    out_cond = discriminator_forward(params, x, y)
    out_uncond = discriminator_forward(params, x, None)
    jax.block_until_ready(out_cond)
    jax.block_until_ready(out_uncond)

    ref_cond = reference_forward(params, x, y)
    ref_uncond = reference_forward(params, x, None)
    assert out_cond.shape == (B, 1)
    assert out_uncond.shape == (B, 1)
    assert jnp.allclose(out_cond, ref_cond, atol=1e-2, rtol=1e-2)
    assert jnp.allclose(out_uncond, ref_uncond, atol=1e-2, rtol=1e-2)

    print("KERNEL_OK")
</pallas_src>

<mosaic_0001>
module attributes {stable_mosaic.version = 11 : i64} {
  func.func @_disc_kernel_cond(%arg0: i32, %arg1: memref<250x16xf32, #tpu.memory_space<vmem>>, %arg2: memref<250x4xf32, #tpu.memory_space<vmem>>, %arg3: memref<16x32xbf16, #tpu.memory_space<vmem>>, %arg4: memref<1x32xf32, #tpu.memory_space<vmem>>, %arg5: memref<32x32xbf16, #tpu.memory_space<vmem>>, %arg6: memref<1x32xf32, #tpu.memory_space<vmem>>, %arg7: memref<1x32xf32, #tpu.memory_space<vmem>>, %arg8: memref<4x32xf32, #tpu.memory_space<vmem>>, %arg9: memref<1x1xf32, #tpu.memory_space<smem>>, %arg10: memref<1x250xf32, #tpu.memory_space<vmem>>) attributes {dimension_semantics = [#tpu.dimension_semantics<parallel>], iteration_bounds = array<i64: 1>, scalar_prefetch = 0 : i64, scratch_operands = 0 : i64, tpu.core_type = #tpu.core_type<tc>, window_params = [{transform_indices = @transform_0, window_bounds = array<i64: 250, 16>}, {transform_indices = @transform_1, window_bounds = array<i64: 250, 4>}, {pipeline_mode = #tpu.pipeline_mode<synchronous>, transform_indices = @transform_2, window_bounds = array<i64: 16, 32>}, {pipeline_mode = #tpu.pipeline_mode<synchronous>, transform_indices = @transform_3, window_bounds = array<i64: 1, 32>}, {pipeline_mode = #tpu.pipeline_mode<synchronous>, transform_indices = @transform_4, window_bounds = array<i64: 32, 32>}, {pipeline_mode = #tpu.pipeline_mode<synchronous>, transform_indices = @transform_5, window_bounds = array<i64: 1, 32>}, {pipeline_mode = #tpu.pipeline_mode<synchronous>, transform_indices = @transform_6, window_bounds = array<i64: 1, 32>}, {pipeline_mode = #tpu.pipeline_mode<synchronous>, transform_indices = @transform_7, window_bounds = array<i64: 4, 32>}, {transform_indices = @transform_8, window_bounds = array<i64: 1, 1>}, {transform_indices = @transform_9, window_bounds = array<i64: 1, 250>}]} {
    %c0 = arith.constant 0 : index
    %c0_0 = arith.constant 0 : index
    %0 = vector.load %arg1[%c0, %c0_0] : memref<250x16xf32, #tpu.memory_space<vmem>>, vector<250x16xf32>
    %1 = arith.truncf %0 : vector<250x16xf32> to vector<250x16xbf16>
    %c0_1 = arith.constant 0 : index
    %c0_2 = arith.constant 0 : index
    %2 = vector.load %arg3[%c0_1, %c0_2] : memref<16x32xbf16, #tpu.memory_space<vmem>>, vector<16x32xbf16>
    %cst = arith.constant dense<0.000000e+00> : vector<250x32xf32>
    %3 = tpu.matmul %1, %2, %cst {dimension_numbers = #tpu.dot_dimension_numbers<[1], [0], [0], [1], [0, 0, 1, 1], [], []>} : vector<250x16xbf16>, vector<16x32xbf16>, vector<250x32xf32> -> vector<250x32xf32>
    %c0_3 = arith.constant 0 : index
    %c0_4 = arith.constant 0 : index
    %4 = vector.load %arg4[%c0_3, %c0_4] : memref<1x32xf32, #tpu.memory_space<vmem>>, vector<1x32xf32>
    %5 = vector.broadcast %4 : vector<1x32xf32> to vector<250x32xf32>
    %6 = arith.addf %3, %5 : vector<250x32xf32>
    %cst_5 = arith.constant 0.000000e+00 : f32
    %7 = vector.broadcast %cst_5 : f32 to vector<250x32xf32>
    %8 = arith.maximumf %6, %7 : vector<250x32xf32>
    %9 = arith.truncf %8 : vector<250x32xf32> to vector<250x32xbf16>
    %c0_6 = arith.constant 0 : index
    %c0_7 = arith.constant 0 : index
    %10 = vector.load %arg5[%c0_6, %c0_7] : memref<32x32xbf16, #tpu.memory_space<vmem>>, vector<32x32xbf16>
    %cst_8 = arith.constant dense<0.000000e+00> : vector<250x32xf32>
    %11 = tpu.matmul %9, %10, %cst_8 {dimension_numbers = #tpu.dot_dimension_numbers<[1], [0], [0], [1], [0, 0, 1, 1], [], []>} : vector<250x32xbf16>, vector<32x32xbf16>, vector<250x32xf32> -> vector<250x32xf32>
    %c0_9 = arith.constant 0 : index
    %c0_10 = arith.constant 0 : index
    %12 = vector.load %arg6[%c0_9, %c0_10] : memref<1x32xf32, #tpu.memory_space<vmem>>, vector<1x32xf32>
    %13 = vector.broadcast %12 : vector<1x32xf32> to vector<250x32xf32>
    %14 = arith.addf %11, %13 : vector<250x32xf32>
    %cst_11 = arith.constant 0.000000e+00 : f32
    %15 = vector.broadcast %cst_11 : f32 to vector<250x32xf32>
    %16 = arith.maximumf %14, %15 : vector<250x32xf32>
    %c0_12 = arith.constant 0 : index
    %c0_13 = arith.constant 0 : index
    %17 = vector.load %arg2[%c0_12, %c0_13] : memref<250x4xf32, #tpu.memory_space<vmem>>, vector<250x4xf32>
    %18 = tpu.iota {dimensions = array<i32: 1>} : vector<250x4xi32>
    %19 = arith.sitofp %18 : vector<250x4xi32> to vector<250x4xf32>
    %cst_14 = arith.constant dense<0xFF800000> : vector<250xf32>
    %20 = vector.multi_reduction <maximumf>, %17, %cst_14 [1] : vector<250x4xf32> to vector<250xf32>
    %21 = vector.shape_cast %20 : vector<250xf32> to vector<250x1xf32>
    %22 = vector.broadcast %21 : vector<250x1xf32> to vector<250x4xf32>
    %23 = arith.cmpf oeq, %17, %22 : vector<250x4xf32>
    %cst_15 = arith.constant 4.000000e+00 : f32
    %24 = vector.broadcast %cst_15 : f32 to vector<250x4xf32>
    %25 = arith.select %23, %19, %24 : vector<250x4xi1>, vector<250x4xf32>
    %cst_16 = arith.constant dense<0x7F800000> : vector<250xf32>
    %26 = vector.multi_reduction <minimumf>, %25, %cst_16 [1] : vector<250x4xf32> to vector<250xf32>
    %27 = vector.shape_cast %26 : vector<250xf32> to vector<250x1xf32>
    %28 = vector.broadcast %27 : vector<250x1xf32> to vector<250x4xf32>
    %29 = arith.cmpf oeq, %19, %28 : vector<250x4xf32>
    %30 = arith.extui %29 : vector<250x4xi1> to vector<250x4xi32>
    %31 = arith.sitofp %30 : vector<250x4xi32> to vector<250x4xf32>
    %c0_17 = arith.constant 0 : index
    %c0_18 = arith.constant 0 : index
    %32 = vector.load %arg8[%c0_17, %c0_18] : memref<4x32xf32, #tpu.memory_space<vmem>>, vector<4x32xf32>
    %cst_19 = arith.constant dense<0.000000e+00> : vector<250x32xf32>
    %33 = tpu.matmul %31, %32, %cst_19 {dimension_numbers = #tpu.dot_dimension_numbers<[1], [0], [0], [1], [0, 0, 1, 1], [], []>} : vector<250x4xf32>, vector<4x32xf32>, vector<250x32xf32> -> vector<250x32xf32>
    %c0_20 = arith.constant 0 : index
    %c0_21 = arith.constant 0 : index
    %34 = vector.load %arg7[%c0_20, %c0_21] : memref<1x32xf32, #tpu.memory_space<vmem>>, vector<1x32xf32>
    %35 = vector.broadcast %34 : vector<1x32xf32> to vector<250x32xf32>
    %36 = arith.addf %35, %33 : vector<250x32xf32>
    %37 = arith.mulf %16, %36 : vector<250x32xf32>
    %cst_22 = arith.constant 1.000000e+00 : f32
    %38 = vector.broadcast %cst_22 : f32 to vector<1x32xf32>
    %cst_23 = arith.constant dense<0.000000e+00> : vector<1x250xf32>
    %39 = tpu.matmul %38, %37, %cst_23 {dimension_numbers = #tpu.dot_dimension_numbers<[1], [1], [0], [0], [0, 0, 1, 0], [], []>} : vector<1x32xf32>, vector<250x32xf32>, vector<1x250xf32> -> vector<1x250xf32>
    %c0_24 = arith.constant 0 : index
    %c0_25 = arith.constant 0 : index
    %40 = memref.load %arg9[%c0_24, %c0_25] : memref<1x1xf32, #tpu.memory_space<smem>>
    %41 = vector.broadcast %40 : f32 to vector<1x250xf32>
    %42 = arith.addf %39, %41 : vector<1x250xf32>
    %c0_26 = arith.constant 0 : index
    %c0_27 = arith.constant 0 : index
    %43 = vector.load %arg10[%c0_26, %c0_27] : memref<1x250xf32, #tpu.memory_space<vmem>>, vector<1x250xf32>
    tpu.vector_store %arg10[%c0_26, %c0_27], %42 {strides = array<i32>} : memref<1x250xf32, #tpu.memory_space<vmem>>, vector<1x250xf32>,
    return
  }
  func.func @transform_0(%arg0: i32) -> (i32, i32) {
    %c0_i32 = arith.constant 0 : i32
    %c0_i32_0 = arith.constant 0 : i32
    return %arg0, %c0_i32 : i32, i32
  }
  func.func @transform_1(%arg0: i32) -> (i32, i32) {
    %c0_i32 = arith.constant 0 : i32
    %c0_i32_0 = arith.constant 0 : i32
    return %arg0, %c0_i32 : i32, i32
  }
  func.func @transform_2(%arg0: i32) -> (i32, i32) {
    %c0_i32 = arith.constant 0 : i32
    %c0_i32_0 = arith.constant 0 : i32
    %c0_i32_1 = arith.constant 0 : i32
    return %c0_i32, %c0_i32_0 : i32, i32
  }
  func.func @transform_3(%arg0: i32) -> (i32, i32) {
    %c0_i32 = arith.constant 0 : i32
    %c0_i32_0 = arith.constant 0 : i32
    %c0_i32_1 = arith.constant 0 : i32
    return %c0_i32, %c0_i32_0 : i32, i32
  }
  func.func @transform_4(%arg0: i32) -> (i32, i32) {
    %c0_i32 = arith.constant 0 : i32
    %c0_i32_0 = arith.constant 0 : i32
    %c0_i32_1 = arith.constant 0 : i32
    return %c0_i32, %c0_i32_0 : i32, i32
  }
  func.func @transform_5(%arg0: i32) -> (i32, i32) {
    %c0_i32 = arith.constant 0 : i32
    %c0_i32_0 = arith.constant 0 : i32
    %c0_i32_1 = arith.constant 0 : i32
    return %c0_i32, %c0_i32_0 : i32, i32
  }
  func.func @transform_6(%arg0: i32) -> (i32, i32) {
    %c0_i32 = arith.constant 0 : i32
    %c0_i32_0 = arith.constant 0 : i32
    %c0_i32_1 = arith.constant 0 : i32
    return %c0_i32, %c0_i32_0 : i32, i32
  }
  func.func @transform_7(%arg0: i32) -> (i32, i32) {
    %c0_i32 = arith.constant 0 : i32
    %c0_i32_0 = arith.constant 0 : i32
    %c0_i32_1 = arith.constant 0 : i32
    return %c0_i32, %c0_i32_0 : i32, i32
  }
  func.func @transform_8(%arg0: i32) -> (i32, i32) {
    %c0_i32 = arith.constant 0 : i32
    %c0_i32_0 = arith.constant 0 : i32
    %c0_i32_1 = arith.constant 0 : i32
    return %c0_i32, %c0_i32_0 : i32, i32
  }
  func.func @transform_9(%arg0: i32) -> (i32, i32) {
    %c0_i32 = arith.constant 0 : i32
    %c0_i32_0 = arith.constant 0 : i32
    return %c0_i32, %arg0 : i32, i32
  }
}

</mosaic_0001>

<llo_original>
// kernel: tpu_custom_call.1
$region0: #{tpu_custom_call.1}
  #allocation0 [shape = 'u32[]', space=smem, size = 0x4, offset = 0x4, fixed_abs, tag = 'smem constant byte address 0x4 - core index']
  #allocation1 [shape = 'u32[144,128]{1,0:T(1,128)}', space=vmem, size = 0x12000, scoped, tag = 'internal scratch']
  #allocation2 [shape = 'f32[1,1]{1,0:T(1,128)S(6)}', space=smem, size = 0x200, scoped, tag = 'scoped memory for tpu_custom_call.1']
  %s0 = inlined_call_operand.vmem [shape: f32[250,16], index: 0, kind: input, shape index: {}]
  %s1 = inlined_call_operand.vmem [shape: f32[250,4], index: 1, kind: input, shape index: {}]
  %s2 = inlined_call_operand.vmem [shape: bf16[16,32], index: 2, kind: input, shape index: {}]
  %s3 = inlined_call_operand.vmem [shape: f32[1,32], index: 3, kind: input, shape index: {}]
  %s4 = inlined_call_operand.vmem [shape: bf16[32,32], index: 4, kind: input, shape index: {}]
  %s5 = inlined_call_operand.vmem [shape: f32[1,32], index: 5, kind: input, shape index: {}]
  %s6 = inlined_call_operand.vmem [shape: f32[1,32], index: 6, kind: input, shape index: {}]
  %s7 = inlined_call_operand.vmem [shape: f32[4,32], index: 7, kind: input, shape index: {}]
  %s8 = inlined_call_operand.<no memory space> [shape: f32[1,1], index: 8, kind: input, shape index: {}]
  %s9 = inlined_call_operand.hbm [shape: f32[1,250], index: 9, kind: output, shape index: {}]
  %s10 = sld [smem:[#allocation0]]
  $region46: #{tpu_custom_call.1} parent=0
    _
  %s12 = ssub.s32 1, %s10
  %s13 = scalar_select 0, %s12, %s10
  %14 = sst [smem:[#allocation2]] %s8
  $region1: #{tpu_custom_call.1} parent=0
    #allocation3 [shape = 'u8[1024]{0}', space=vmem, size = 0x400, scoped, tag = 'output window, operand 0, single buffered']
    #allocation4 [shape = 's32[1]{0}', space=sflag, size = 0x4, scoped, tag = 'scoped memory for tpu_custom_call.1']
    %15 = vsyncpa [#allocation4], 0
    // Predicated region
    $region2: #{tpu_custom_call.1} parent=1 // pred_check
      _
    $region3: #{tpu_custom_call.1} parent=1 // pred_check_branch
      %17 = sbr.rel (0) target = $region5
    $region4: #{tpu_custom_call.1} parent=1 // pred_region
      _
    $region5: #{tpu_custom_call.1} parent=1 // pred_fallthru
      _
    // Predicated region
    $region6: #{tpu_custom_call.1} parent=1 // pred_check
      _
    $region7: #{tpu_custom_call.1} parent=1 // pred_check_branch
      %19 = sbr.rel (0) target = $region9
    $region8: #{tpu_custom_call.1} parent=1 // pred_region
      _
    $region9: #{tpu_custom_call.1} parent=1 // pred_fallthru
      _
    // Predicated region
    $region10: #{tpu_custom_call.1} parent=1 // pred_check
      _
    $region11: #{tpu_custom_call.1} parent=1 // pred_check_branch
      %21 = sbr.rel (0) target = $region13
    $region12: #{tpu_custom_call.1} parent=1 // pred_region
      _
    $region13: #{tpu_custom_call.1} parent=1 // pred_fallthru
      _
    // Predicated region
    $region14: #{tpu_custom_call.1} parent=1 // pred_check
      _
    $region15: #{tpu_custom_call.1} parent=1 // pred_check_branch
      %23 = sbr.rel (0) target = $region17
    $region16: #{tpu_custom_call.1} parent=1 // pred_region
      _
    $region17: #{tpu_custom_call.1} parent=1 // pred_fallthru
      _
    // Predicated region
    $region18: #{tpu_custom_call.1} parent=1 // pred_check
      _
    $region19: #{tpu_custom_call.1} parent=1 // pred_check_branch
      %25 = sbr.rel (0) target = $region21
    $region20: #{tpu_custom_call.1} parent=1 // pred_region
      _
    $region21: #{tpu_custom_call.1} parent=1 // pred_fallthru
      _
    // Predicated region
    $region22: #{tpu_custom_call.1} parent=1 // pred_check
      _
    $region23: #{tpu_custom_call.1} parent=1 // pred_check_branch
      %27 = sbr.rel (0) target = $region25
    $region24: #{tpu_custom_call.1} parent=1 // pred_region
      _
    $region25: #{tpu_custom_call.1} parent=1 // pred_fallthru
      _
    // Predicated region
    $region26: #{tpu_custom_call.1} parent=1 // pred_check
      _
    $region27: #{tpu_custom_call.1} parent=1 // pred_check_branch
      %29 = sbr.rel (0) target = $region29
    $region28: #{tpu_custom_call.1} parent=1 // pred_region
      _
    $region29: #{tpu_custom_call.1} parent=1 // pred_fallthru
      _
    // Predicated region
    $region30: #{tpu_custom_call.1} parent=1 // pred_check
      _
    $region31: #{tpu_custom_call.1} parent=1 // pred_check_branch
      %31 = sbr.rel (0) target = $region33
    $region32: #{tpu_custom_call.1} parent=1 // pred_region
      _
    $region33: #{tpu_custom_call.1} parent=1 // pred_fallthru
      _
    // Predicated region
    $region34: #{tpu_custom_call.1} parent=1 // pred_check
      _
    $region35: #{tpu_custom_call.1} parent=1 // pred_check_branch
      %33 = sbr.rel (0) target = $region37
    $region36: #{tpu_custom_call.1} parent=1 // pred_region
      _
    $region37: #{tpu_custom_call.1} parent=1 // pred_fallthru
      _
    %v35 = vld [vmem:[%s0] sm:$0xff]
    %v36 = vld [vmem:[%s0 + $0x8] sm:$0xff]
    %v37 = vld [vmem:[%s0 + $0x10] sm:$0xff]
    %v38 = vld [vmem:[%s0 + $0x18] sm:$0xff]
    %v39 = vld [vmem:[%s0 + $0x20] sm:$0xff]
    %v40 = vld [vmem:[%s0 + $0x28] sm:$0xff]
    %v41 = vld [vmem:[%s0 + $0x30] sm:$0xff]
    %v42 = vld [vmem:[%s0 + $0x38] sm:$0xff]
    %v43 = vld [vmem:[%s0 + $0x40] sm:$0xff]
    %v44 = vld [vmem:[%s0 + $0x48] sm:$0xff]
    %v45 = vld [vmem:[%s0 + $0x50] sm:$0xff]
    %v46 = vld [vmem:[%s0 + $0x58] sm:$0xff]
    %v47 = vld [vmem:[%s0 + $0x60] sm:$0xff]
    %v48 = vld [vmem:[%s0 + $0x68] sm:$0xff]
    %v49 = vld [vmem:[%s0 + $0x70] sm:$0xff]
    %v50 = vld [vmem:[%s0 + $0x78] sm:$0xff]
    %v51 = vld [vmem:[%s0 + $0x80] sm:$0xff]
    %v52 = vld [vmem:[%s0 + $0x88] sm:$0xff]
    %v53 = vld [vmem:[%s0 + $0x90] sm:$0xff]
    %v54 = vld [vmem:[%s0 + $0x98] sm:$0xff]
    %v55 = vld [vmem:[%s0 + $0xa0] sm:$0xff]
    %v56 = vld [vmem:[%s0 + $0xa8] sm:$0xff]
    %v57 = vld [vmem:[%s0 + $0xb0] sm:$0xff]
    %v58 = vld [vmem:[%s0 + $0xb8] sm:$0xff]
    %v59 = vld [vmem:[%s0 + $0xc0] sm:$0xff]
    %v60 = vld [vmem:[%s0 + $0xc8] sm:$0xff]
    %v61 = vld [vmem:[%s0 + $0xd0] sm:$0xff]
    %v62 = vld [vmem:[%s0 + $0xd8] sm:$0xff]
    %v63 = vld [vmem:[%s0 + $0xe0] sm:$0xff]
    %v64 = vld [vmem:[%s0 + $0xe8] sm:$0xff]
    %v65 = vld [vmem:[%s0 + $0xf0] sm:$0xff]
    %v66 = vld [vmem:[%s0 + $0xf8] sm:$0x3]
    %v67 = vpack.c.bf16 %v36, %v35
    %v68 = vpack.c.bf16 %v38, %v37
    %v69 = vpack.c.bf16 %v40, %v39
    %v70 = vpack.c.bf16 %v42, %v41
    %v71 = vpack.c.bf16 %v44, %v43
    %v72 = vpack.c.bf16 %v46, %v45
    %v73 = vpack.c.bf16 %v48, %v47
    %v74 = vpack.c.bf16 %v50, %v49
    %v75 = vpack.c.bf16 %v52, %v51
    %v76 = vpack.c.bf16 %v54, %v53
    %v77 = vpack.c.bf16 %v56, %v55
    %v78 = vpack.c.bf16 %v58, %v57
    %v79 = vpack.c.bf16 %v60, %v59
    %v80 = vpack.c.bf16 %v62, %v61
    %v81 = vpack.c.bf16 %v64, %v63
    %v82 = vpack.c.bf16 %v66, %v65
    %v83 = vld [vmem:[%s2] sm:$0xf]
    %v84 = vld [vmem:[%s2 + $0x4] sm:$0xf]
    %v85 = vld [vmem:[%s3] sm:$0x1]
    %v87 = vlaneseq
    %v88 = vshrl.u32 %v87, 7
    %v89 = vsub.s32 0, %v88
    %v90 = vrot.slane %v85, %v89
    %v94 = vunpack.c.l.b16 %v83
    %v95 = vunpack.c.l.b16 %v84
    %v96 = vpack.c.b16 %v95, %v94
    %vm98 = vcmask 130048
    %v100 = vsel %vm98, %v67, 0
    %v103 = vsel %vm98, %v68, 0
    %v106 = vsel %vm98, %v69, 0
    %v109 = vsel %vm98, %v70, 0
    %v112 = vsel %vm98, %v71, 0
    %v115 = vsel %vm98, %v72, 0
    %v118 = vsel %vm98, %v73, 0
    %v121 = vsel %vm98, %v74, 0
    %v124 = vsel %vm98, %v75, 0
    %v127 = vsel %vm98, %v76, 0
    %v130 = vsel %vm98, %v77, 0
    %v133 = vsel %vm98, %v78, 0
    %v136 = vsel %vm98, %v79, 0
    %v139 = vsel %vm98, %v80, 0
    %v142 = vsel %vm98, %v81, 0
    %v145 = vsel %vm98, %v82, 0
    %147 = vmatprep.subr.bf16.mxu0 0
    %148 = vmatpush1.bf16.msra.mxu0 %v96
    %149 = vmatprep.subr.bf16.mxu0 0
    %150 = vmatpush1.bf16.msra.mxu0 0
    %151 = vmatprep.subr.bf16.mxu0 0
    %152 = vmatpush1.bf16.msra.mxu0 0
    %153 = vmatprep.subr.bf16.mxu0 0
    %154 = vmatpush1.bf16.msra.mxu0 0
    %155 = vmatprep.subr.bf16.mxu0 0
    %156 = vmatpush1.bf16.msra.mxu0 0
    %157 = vmatprep.subr.bf16.mxu0 0
    %158 = vmatpush1.bf16.msra.mxu0 0
    %159 = vmatprep.subr.bf16.mxu0 0
    %160 = vmatpush1.bf16.msra.mxu0 0
    %161 = vmatprep.subr.bf16.mxu0 0
    %162 = vmatpush1.bf16.msra.mxu0 0
    %163 = vmatprep.subr.bf16.mxu0 0
    %164 = vmatpush1.bf16.msra.mxu0 0
    %165 = vmatprep.subr.bf16.mxu0 0
    %166 = vmatpush1.bf16.msra.mxu0 0
    %167 = vmatprep.subr.bf16.mxu0 0
    %168 = vmatpush1.bf16.msra.mxu0 0
    %169 = vmatprep.subr.bf16.mxu0 0
    %170 = vmatpush1.bf16.msra.mxu0 0
    %171 = vmatprep.subr.bf16.mxu0 0
    %172 = vmatpush1.bf16.msra.mxu0 0
    %173 = vmatprep.subr.bf16.mxu0 0
    %174 = vmatpush1.bf16.msra.mxu0 0
    %175 = vmatprep.subr.bf16.mxu0 0
    %176 = vmatpush1.bf16.msra.mxu0 0
    %177 = vmatprep.subr.bf16.mxu0 0
    %178 = vmatpush1.bf16.msra.mxu0 0
    %179 = vmatprep.mubr.bf16.mxu0 0
    %180 = vmatmul.mubr.bf16.gmra.mrb[0].mxu0 %v100
    %v181 = vpop.f32.mrb[0].mxu0
    %v182 = vadd.f32 %v90, %v181
    %v183 = vpop.f32.mrb[0].mxu0
    %v184 = vpop.f32.mrb[0].mxu0
    %v185 = vadd.f32 %v90, %v184
    %v186 = vpop.f32.mrb[0].mxu0
    %187 = vmatprep.mubr.bf16.mxu0 0
    %188 = vmatmul.mubr.bf16.gmra.mrb[0].mxu0 %v103
    %v189 = vpop.f32.mrb[0].mxu0
    %v190 = vadd.f32 %v90, %v189
    %v191 = vpop.f32.mrb[0].mxu0
    %v192 = vpop.f32.mrb[0].mxu0
    %v193 = vadd.f32 %v90, %v192
    %v194 = vpop.f32.mrb[0].mxu0
    %195 = vmatprep.mubr.bf16.mxu0 0
    %196 = vmatmul.mubr.bf16.gmra.mrb[0].mxu0 %v106
    %v197 = vpop.f32.mrb[0].mxu0
    %v198 = vadd.f32 %v90, %v197
    %v199 = vpop.f32.mrb[0].mxu0
    %v200 = vpop.f32.mrb[0].mxu0
    %v201 = vadd.f32 %v90, %v200
    %v202 = vpop.f32.mrb[0].mxu0
    %203 = vmatprep.mubr.bf16.mxu0 0
    %204 = vmatmul.mubr.bf16.gmra.mrb[0].mxu0 %v109
    %v205 = vpop.f32.mrb[0].mxu0
    %v206 = vadd.f32 %v90, %v205
    %v207 = vpop.f32.mrb[0].mxu0
    %v208 = vpop.f32.mrb[0].mxu0
    %v209 = vadd.f32 %v90, %v208
    %v210 = vpop.f32.mrb[0].mxu0
    %211 = vmatprep.mubr.bf16.mxu0 0
    %212 = vmatmul.mubr.bf16.gmra.mrb[0].mxu0 %v112
    %v213 = vpop.f32.mrb[0].mxu0
    %v214 = vadd.f32 %v90, %v213
    %v215 = vpop.f32.mrb[0].mxu0
    %v216 = vpop.f32.mrb[0].mxu0
    %v217 = vadd.f32 %v90, %v216
    %v218 = vpop.f32.mrb[0].mxu0
    %219 = vmatprep.mubr.bf16.mxu0 0
    %220 = vmatmul.mubr.bf16.gmra.mrb[0].mxu0 %v115
    %v221 = vpop.f32.mrb[0].mxu0
    %v222 = vadd.f32 %v90, %v221
    %v223 = vpop.f32.mrb[0].mxu0
    %v224 = vpop.f32.mrb[0].mxu0
    %v225 = vadd.f32 %v90, %v224
    %v226 = vpop.f32.mrb[0].mxu0
    %227 = vmatprep.mubr.bf16.mxu0 0
    %228 = vmatmul.mubr.bf16.gmra.mrb[0].mxu0 %v118
    %v229 = vpop.f32.mrb[0].mxu0
    %v230 = vadd.f32 %v90, %v229
    %v231 = vpop.f32.mrb[0].mxu0
    %v232 = vpop.f32.mrb[0].mxu0
    %v233 = vadd.f32 %v90, %v232
    %v234 = vpop.f32.mrb[0].mxu0
    %235 = vmatprep.mubr.bf16.mxu0 0
    %236 = vmatmul.mubr.bf16.gmra.mrb[0].mxu0 %v121
    %v237 = vpop.f32.mrb[0].mxu0
    %v238 = vadd.f32 %v90, %v237
    %v239 = vpop.f32.mrb[0].mxu0
    %v240 = vpop.f32.mrb[0].mxu0
    %v241 = vadd.f32 %v90, %v240
    %v242 = vpop.f32.mrb[0].mxu0
    %243 = vmatprep.mubr.bf16.mxu0 0
    %244 = vmatmul.mubr.bf16.gmra.mrb[0].mxu0 %v124
    %v245 = vpop.f32.mrb[0].mxu0
    %v246 = vadd.f32 %v90, %v245
    %v247 = vpop.f32.mrb[0].mxu0
    %v248 = vpop.f32.mrb[0].mxu0
    %v249 = vadd.f32 %v90, %v248
    %v250 = vpop.f32.mrb[0].mxu0
    %251 = vmatprep.mubr.bf16.mxu0 0
    %252 = vmatmul.mubr.bf16.gmra.mrb[0].mxu0 %v127
    %v253 = vpop.f32.mrb[0].mxu0
    %v254 = vadd.f32 %v90, %v253
    %v255 = vpop.f32.mrb[0].mxu0
    %v256 = vpop.f32.mrb[0].mxu0
    %v257 = vadd.f32 %v90, %v256
    %v258 = vpop.f32.mrb[0].mxu0
    %259 = vmatprep.mubr.bf16.mxu0 0
    %260 = vmatmul.mubr.bf16.gmra.mrb[0].mxu0 %v130
    %v261 = vpop.f32.mrb[0].mxu0
    %v262 = vadd.f32 %v90, %v261
    %v263 = vpop.f32.mrb[0].mxu0
    %v264 = vpop.f32.mrb[0].mxu0
    %v265 = vadd.f32 %v90, %v264
    %v266 = vpop.f32.mrb[0].mxu0
    %267 = vmatprep.mubr.bf16.mxu0 0
    %268 = vmatmul.mubr.bf16.gmra.mrb[0].mxu0 %v133
    %v269 = vpop.f32.mrb[0].mxu0
    %v270 = vadd.f32 %v90, %v269
    %v271 = vpop.f32.mrb[0].mxu0
    %v272 = vpop.f32.mrb[0].mxu0
    %v273 = vadd.f32 %v90, %v272
    %v274 = vpop.f32.mrb[0].mxu0
    %275 = vmatprep.mubr.bf16.mxu0 0
    %276 = vmatmul.mubr.bf16.gmra.mrb[0].mxu0 %v136
    %v277 = vpop.f32.mrb[0].mxu0
    %v278 = vadd.f32 %v90, %v277
    %v279 = vpop.f32.mrb[0].mxu0
    %v280 = vpop.f32.mrb[0].mxu0
    %v281 = vadd.f32 %v90, %v280
    %v282 = vpop.f32.mrb[0].mxu0
    %283 = vmatprep.mubr.bf16.mxu0 0
    %284 = vmatmul.mubr.bf16.gmra.mrb[0].mxu0 %v139
    %v285 = vpop.f32.mrb[0].mxu0
    %v286 = vadd.f32 %v90, %v285
    %v287 = vpop.f32.mrb[0].mxu0
    %v288 = vpop.f32.mrb[0].mxu0
    %v289 = vadd.f32 %v90, %v288
    %v290 = vpop.f32.mrb[0].mxu0
    %291 = vmatprep.mubr.bf16.mxu0 0
    %292 = vmatmul.mubr.bf16.gmra.mrb[0].mxu0 %v142
    %v293 = vpop.f32.mrb[0].mxu0
    %v294 = vadd.f32 %v90, %v293
    %v295 = vpop.f32.mrb[0].mxu0
    %v296 = vpop.f32.mrb[0].mxu0
    %v297 = vadd.f32 %v90, %v296
    %v298 = vpop.f32.mrb[0].mxu0
    %299 = vmatprep.mubr.bf16.mxu0 0
    %300 = vmatmul.mubr.bf16.gmra.mrb[0].mxu0 %v145
    %v301 = vpop.f32.mrb[0].mxu0
    %v302 = vadd.f32 %v90, %v301
    %v303 = vpop.f32.mrb[0].mxu0
    %v304 = vpop.f32.mrb[0].mxu0
    %v305 = vadd.f32 %v90, %v304
    %v306 = vpop.f32.mrb[0].mxu0
    %307 = vdwg.mxu0
    %v308 = vmax.f32 %v182, 0.0
    %v309 = vmax.f32 %v185, 0.0
    %v310 = vmax.f32 %v190, 0.0
    %v311 = vmax.f32 %v193, 0.0
    %v312 = vmax.f32 %v198, 0.0
    %v313 = vmax.f32 %v201, 0.0
    %v314 = vmax.f32 %v206, 0.0
    %v315 = vmax.f32 %v209, 0.0
    %v316 = vmax.f32 %v214, 0.0
    %v317 = vmax.f32 %v217, 0.0
    %v318 = vmax.f32 %v222, 0.0
    %v319 = vmax.f32 %v225, 0.0
    %v320 = vmax.f32 %v230, 0.0
    %v321 = vmax.f32 %v233, 0.0
    %v322 = vmax.f32 %v238, 0.0
    %v323 = vmax.f32 %v241, 0.0
    %v324 = vmax.f32 %v246, 0.0
    %v325 = vmax.f32 %v249, 0.0
    %v326 = vmax.f32 %v254, 0.0
    %v327 = vmax.f32 %v257, 0.0
    %v328 = vmax.f32 %v262, 0.0
    %v329 = vmax.f32 %v265, 0.0
    %v330 = vmax.f32 %v270, 0.0
    %v331 = vmax.f32 %v273, 0.0
    %v332 = vmax.f32 %v278, 0.0
    %v333 = vmax.f32 %v281, 0.0
    %v334 = vmax.f32 %v286, 0.0
    %v335 = vmax.f32 %v289, 0.0
    %v336 = vmax.f32 %v294, 0.0
    %v337 = vmax.f32 %v297, 0.0
    %v338 = vmax.f32 %v302, 0.0
    %v339 = vmax.f32 %v305, 0.0
    %v340 = vpack.c.bf16 %v309, %v308
    %v341 = vpack.c.bf16 %v311, %v310
    %v342 = vpack.c.bf16 %v313, %v312
    %v343 = vpack.c.bf16 %v315, %v314
    %v344 = vpack.c.bf16 %v317, %v316
    %v345 = vpack.c.bf16 %v319, %v318
    %v346 = vpack.c.bf16 %v321, %v320
    %v347 = vpack.c.bf16 %v323, %v322
    %v348 = vpack.c.bf16 %v325, %v324
    %v349 = vpack.c.bf16 %v327, %v326
    %v350 = vpack.c.bf16 %v329, %v328
    %v351 = vpack.c.bf16 %v331, %v330
    %v352 = vpack.c.bf16 %v333, %v332
    %v353 = vpack.c.bf16 %v335, %v334
    %v354 = vpack.c.bf16 %v337, %v336
    %v355 = vpack.c.bf16 %v339, %v338
    %v356 = vld [vmem:[%s4] sm:$0xf]
    %v357 = vld [vmem:[%s4 + $0x4] sm:$0xf]
    %v358 = vld [vmem:[%s4 + $0x8] sm:$0xf]
    %v359 = vld [vmem:[%s4 + $0xc] sm:$0xf]
    %v360 = vld [vmem:[%s5] sm:$0x1]
    %v362 = vlaneseq
    %v363 = vshrl.u32 %v362, 7
    %v364 = vsub.s32 0, %v363
    %v365 = vrot.slane %v360, %v364
    %v371 = vunpack.c.l.b16 %v356
    %v372 = vunpack.c.l.b16 %v357
    %v373 = vunpack.c.l.b16 %v358
    %v374 = vunpack.c.l.b16 %v359
    %v375 = vpack.c.b16 %v372, %v371
    %v376 = vpack.c.b16 %v374, %v373
    %vm379 = vcmask 261120
    %v381 = vsel %vm379, %v340, 0
    %v384 = vsel %vm379, %v341, 0
    %v387 = vsel %vm379, %v342, 0
    %v390 = vsel %vm379, %v343, 0
    %v393 = vsel %vm379, %v344, 0
    %v396 = vsel %vm379, %v345, 0
    %v399 = vsel %vm379, %v346, 0
    %v402 = vsel %vm379, %v347, 0
    %v405 = vsel %vm379, %v348, 0
    %v408 = vsel %vm379, %v349, 0
    %v411 = vsel %vm379, %v350, 0
    %v414 = vsel %vm379, %v351, 0
    %v417 = vsel %vm379, %v352, 0
    %v420 = vsel %vm379, %v353, 0
    %v423 = vsel %vm379, %v354, 0
    %v426 = vsel %vm379, %v355, 0
    %428 = vmatprep.subr.bf16.mxu0 0
    %429 = vmatpush1.bf16.msra.mxu0 %v375
    %430 = vmatprep.subr.bf16.mxu0 0
    %431 = vmatpush1.bf16.msra.mxu0 %v376
    %432 = vmatprep.subr.bf16.mxu0 0
    %433 = vmatpush1.bf16.msra.mxu0 0
    %434 = vmatprep.subr.bf16.mxu0 0
    %435 = vmatpush1.bf16.msra.mxu0 0
    %436 = vmatprep.subr.bf16.mxu0 0
    %437 = vmatpush1.bf16.msra.mxu0 0
    %438 = vmatprep.subr.bf16.mxu0 0
    %439 = vmatpush1.bf16.msra.mxu0 0
    %440 = vmatprep.subr.bf16.mxu0 0
    %441 = vmatpush1.bf16.msra.mxu0 0
    %442 = vmatprep.subr.bf16.mxu0 0
    %443 = vmatpush1.bf16.msra.mxu0 0
    %444 = vmatprep.subr.bf16.mxu0 0
    %445 = vmatpush1.bf16.msra.mxu0 0
    %446 = vmatprep.subr.bf16.mxu0 0
    %447 = vmatpush1.bf16.msra.mxu0 0
    %448 = vmatprep.subr.bf16.mxu0 0
    %449 = vmatpush1.bf16.msra.mxu0 0
    %450 = vmatprep.subr.bf16.mxu0 0
    %451 = vmatpush1.bf16.msra.mxu0 0
    %452 = vmatprep.subr.bf16.mxu0 0
    %453 = vmatpush1.bf16.msra.mxu0 0
    %454 = vmatprep.subr.bf16.mxu0 0
    %455 = vmatpush1.bf16.msra.mxu0 0
    %456 = vmatprep.subr.bf16.mxu0 0
    %457 = vmatpush1.bf16.msra.mxu0 0
    %458 = vmatprep.subr.bf16.mxu0 0
    %459 = vmatpush1.bf16.msra.mxu0 0
    %460 = vmatprep.mubr.bf16.mxu0 0
    %461 = vmatmul.mubr.bf16.gmra.mrb[0].mxu0 %v381
    %v462 = vpop.f32.mrb[0].mxu0
    %v463 = vadd.f32 %v365, %v462
    %v464 = vpop.f32.mrb[0].mxu0
    %v465 = vpop.f32.mrb[0].mxu0
    %v466 = vadd.f32 %v365, %v465
    %v467 = vpop.f32.mrb[0].mxu0
    %468 = vmatprep.mubr.bf16.mxu0 0
    %469 = vmatmul.mubr.bf16.gmra.mrb[0].mxu0 %v384
    %v470 = vpop.f32.mrb[0].mxu0
    %v471 = vadd.f32 %v365, %v470
    %v472 = vpop.f32.mrb[0].mxu0
    %v473 = vpop.f32.mrb[0].mxu0
    %v474 = vadd.f32 %v365, %v473
    %v475 = vpop.f32.mrb[0].mxu0
    %476 = vmatprep.mubr.bf16.mxu0 0
    %477 = vmatmul.mubr.bf16.gmra.mrb[0].mxu0 %v387
    %v478 = vpop.f32.mrb[0].mxu0
    %v479 = vadd.f32 %v365, %v478
    %v480 = vpop.f32.mrb[0].mxu0
    %v481 = vpop.f32.mrb[0].mxu0
    %v482 = vadd.f32 %v365, %v481
    %v483 = vpop.f32.mrb[0].mxu0
    %484 = vmatprep.mubr.bf16.mxu0 0
    %485 = vmatmul.mubr.bf16.gmra.mrb[0].mxu0 %v390
    %v486 = vpop.f32.mrb[0].mxu0
    %v487 = vadd.f32 %v365, %v486
    %v488 = vpop.f32.mrb[0].mxu0
    %v489 = vpop.f32.mrb[0].mxu0
    %v490 = vadd.f32 %v365, %v489
    %v491 = vpop.f32.mrb[0].mxu0
    %492 = vmatprep.mubr.bf16.mxu0 0
    %493 = vmatmul.mubr.bf16.gmra.mrb[0].mxu0 %v393
    %v494 = vpop.f32.mrb[0].mxu0
    %v495 = vadd.f32 %v365, %v494
    %v496 = vpop.f32.mrb[0].mxu0
    %v497 = vpop.f32.mrb[0].mxu0
    %v498 = vadd.f32 %v365, %v497
    %v499 = vpop.f32.mrb[0].mxu0
    %500 = vmatprep.mubr.bf16.mxu0 0
    %501 = vmatmul.mubr.bf16.gmra.mrb[0].mxu0 %v396
    %v502 = vpop.f32.mrb[0].mxu0
    %v503 = vadd.f32 %v365, %v502
    %v504 = vpop.f32.mrb[0].mxu0
    %v505 = vpop.f32.mrb[0].mxu0
    %v506 = vadd.f32 %v365, %v505
    %v507 = vpop.f32.mrb[0].mxu0
    %508 = vmatprep.mubr.bf16.mxu0 0
    %509 = vmatmul.mubr.bf16.gmra.mrb[0].mxu0 %v399
    %v510 = vpop.f32.mrb[0].mxu0
    %v511 = vadd.f32 %v365, %v510
    %v512 = vpop.f32.mrb[0].mxu0
    %v513 = vpop.f32.mrb[0].mxu0
    %v514 = vadd.f32 %v365, %v513
    %v515 = vpop.f32.mrb[0].mxu0
    %516 = vmatprep.mubr.bf16.mxu0 0
    %517 = vmatmul.mubr.bf16.gmra.mrb[0].mxu0 %v402
    %v518 = vpop.f32.mrb[0].mxu0
    %v519 = vadd.f32 %v365, %v518
    %v520 = vpop.f32.mrb[0].mxu0
    %v521 = vpop.f32.mrb[0].mxu0
    %v522 = vadd.f32 %v365, %v521
    %v523 = vpop.f32.mrb[0].mxu0
    %524 = vmatprep.mubr.bf16.mxu0 0
    %525 = vmatmul.mubr.bf16.gmra.mrb[0].mxu0 %v405
    %v526 = vpop.f32.mrb[0].mxu0
    %v527 = vadd.f32 %v365, %v526
    %v528 = vpop.f32.mrb[0].mxu0
    %v529 = vpop.f32.mrb[0].mxu0
    %v530 = vadd.f32 %v365, %v529
    %v531 = vpop.f32.mrb[0].mxu0
    %532 = vmatprep.mubr.bf16.mxu0 0
    %533 = vmatmul.mubr.bf16.gmra.mrb[0].mxu0 %v408
    %v534 = vpop.f32.mrb[0].mxu0
    %v535 = vadd.f32 %v365, %v534
    %v536 = vpop.f32.mrb[0].mxu0
    %v537 = vpop.f32.mrb[0].mxu0
    %v538 = vadd.f32 %v365, %v537
    %v539 = vpop.f32.mrb[0].mxu0
    %540 = vmatprep.mubr.bf16.mxu0 0
    %541 = vmatmul.mubr.bf16.gmra.mrb[0].mxu0 %v411
    %v542 = vpop.f32.mrb[0].mxu0
    %v543 = vadd.f32 %v365, %v542
    %v544 = vpop.f32.mrb[0].mxu0
    %v545 = vpop.f32.mrb[0].mxu0
    %v546 = vadd.f32 %v365, %v545
    %v547 = vpop.f32.mrb[0].mxu0
    %548 = vmatprep.mubr.bf16.mxu0 0
    %549 = vmatmul.mubr.bf16.gmra.mrb[0].mxu0 %v414
    %v550 = vpop.f32.mrb[0].mxu0
    %v551 = vadd.f32 %v365, %v550
    %v552 = vpop.f32.mrb[0].mxu0
    %v553 = vpop.f32.mrb[0].mxu0
    %v554 = vadd.f32 %v365, %v553
    %v555 = vpop.f32.mrb[0].mxu0
    %556 = vmatprep.mubr.bf16.mxu0 0
    %557 = vmatmul.mubr.bf16.gmra.mrb[0].mxu0 %v417
    %v558 = vpop.f32.mrb[0].mxu0
    %v559 = vadd.f32 %v365, %v558
    %v560 = vpop.f32.mrb[0].mxu0
    %v561 = vpop.f32.mrb[0].mxu0
    %v562 = vadd.f32 %v365, %v561
    %v563 = vpop.f32.mrb[0].mxu0
    %564 = vmatprep.mubr.bf16.mxu0 0
    %565 = vmatmul.mubr.bf16.gmra.mrb[0].mxu0 %v420
    %v566 = vpop.f32.mrb[0].mxu0
    %v567 = vadd.f32 %v365, %v566
    %v568 = vpop.f32.mrb[0].mxu0
    %v569 = vpop.f32.mrb[0].mxu0
    %v570 = vadd.f32 %v365, %v569
    %v571 = vpop.f32.mrb[0].mxu0
    %572 = vmatprep.mubr.bf16.mxu0 0
    %573 = vmatmul.mubr.bf16.gmra.mrb[0].mxu0 %v423
    %v574 = vpop.f32.mrb[0].mxu0
    %v575 = vadd.f32 %v365, %v574
    %v576 = vpop.f32.mrb[0].mxu0
    %v577 = vpop.f32.mrb[0].mxu0
    %v578 = vadd.f32 %v365, %v577
    %v579 = vpop.f32.mrb[0].mxu0
    %580 = vmatprep.mubr.bf16.mxu0 0
    %581 = vmatmul.mubr.bf16.gmra.mrb[0].mxu0 %v426
    %v582 = vpop.f32.mrb[0].mxu0
    %v583 = vadd.f32 %v365, %v582
    %v584 = vpop.f32.mrb[0].mxu0
    %v585 = vpop.f32.mrb[0].mxu0
    %v586 = vadd.f32 %v365, %v585
    %v587 = vpop.f32.mrb[0].mxu0
    %588 = vdwg.mxu0
    %v589 = vmax.f32 %v463, 0.0
    %v590 = vmax.f32 %v466, 0.0
    %v591 = vmax.f32 %v471, 0.0
    %v592 = vmax.f32 %v474, 0.0
    %v593 = vmax.f32 %v479, 0.0
    %v594 = vmax.f32 %v482, 0.0
    %v595 = vmax.f32 %v487, 0.0
    %v596 = vmax.f32 %v490, 0.0
    %v597 = vmax.f32 %v495, 0.0
    %v598 = vmax.f32 %v498, 0.0
    %v599 = vmax.f32 %v503, 0.0
    %v600 = vmax.f32 %v506, 0.0
    %v601 = vmax.f32 %v511, 0.0
    %v602 = vmax.f32 %v514, 0.0
    %v603 = vmax.f32 %v519, 0.0
    %v604 = vmax.f32 %v522, 0.0
    %v605 = vmax.f32 %v527, 0.0
    %v606 = vmax.f32 %v530, 0.0
    %v607 = vmax.f32 %v535, 0.0
    %v608 = vmax.f32 %v538, 0.0
    %v609 = vmax.f32 %v543, 0.0
    %v610 = vmax.f32 %v546, 0.0
    %v611 = vmax.f32 %v551, 0.0
    %v612 = vmax.f32 %v554, 0.0
    %v613 = vmax.f32 %v559, 0.0
    %v614 = vmax.f32 %v562, 0.0
    %v615 = vmax.f32 %v567, 0.0
    %v616 = vmax.f32 %v570, 0.0
    %v617 = vmax.f32 %v575, 0.0
    %v618 = vmax.f32 %v578, 0.0
    %v619 = vmax.f32 %v583, 0.0
    %v620 = vmax.f32 %v586, 0.0
    %v621 = vld [vmem:[%s1] sm:$0xff]
    %v622 = vld [vmem:[%s1 + $0x8] sm:$0xff]
    %v623 = vld [vmem:[%s1 + $0x10] sm:$0xff]
    %v624 = vld [vmem:[%s1 + $0x18] sm:$0xff]
    %v625 = vld [vmem:[%s1 + $0x20] sm:$0xff]
    %v626 = vld [vmem:[%s1 + $0x28] sm:$0xff]
    %v627 = vld [vmem:[%s1 + $0x30] sm:$0xff]
    %v628 = vld [vmem:[%s1 + $0x38] sm:$0xff]
    %v629 = vld [vmem:[%s1 + $0x40] sm:$0xff]
    %v630 = vld [vmem:[%s1 + $0x48] sm:$0xff]
    %v631 = vld [vmem:[%s1 + $0x50] sm:$0xff]
    %v632 = vld [vmem:[%s1 + $0x58] sm:$0xff]
    %v633 = vld [vmem:[%s1 + $0x60] sm:$0xff]
    %v634 = vld [vmem:[%s1 + $0x68] sm:$0xff]
    %v635 = vld [vmem:[%s1 + $0x70] sm:$0xff]
    %v636 = vld [vmem:[%s1 + $0x78] sm:$0xff]
    %v637 = vld [vmem:[%s1 + $0x80] sm:$0xff]
    %v638 = vld [vmem:[%s1 + $0x88] sm:$0xff]
    %v639 = vld [vmem:[%s1 + $0x90] sm:$0xff]
    %v640 = vld [vmem:[%s1 + $0x98] sm:$0xff]
    %v641 = vld [vmem:[%s1 + $0xa0] sm:$0xff]
    %v642 = vld [vmem:[%s1 + $0xa8] sm:$0xff]
    %v643 = vld [vmem:[%s1 + $0xb0] sm:$0xff]
    %v644 = vld [vmem:[%s1 + $0xb8] sm:$0xff]
    %v645 = vld [vmem:[%s1 + $0xc0] sm:$0xff]
    %v646 = vld [vmem:[%s1 + $0xc8] sm:$0xff]
    %v647 = vld [vmem:[%s1 + $0xd0] sm:$0xff]
    %v648 = vld [vmem:[%s1 + $0xd8] sm:$0xff]
    %v649 = vld [vmem:[%s1 + $0xe0] sm:$0xff]
    %v650 = vld [vmem:[%s1 + $0xe8] sm:$0xff]
    %v651 = vld [vmem:[%s1 + $0xf0] sm:$0xff]
    %v652 = vld [vmem:[%s1 + $0xf8] sm:$0x3]
    %v653 = vlaneseq
    %v654 = vand.u32 %v653, 127
    %v655 = vcvt.s32.f32 %v654
    %vm656 = vcmask 31744
    %v657 = vsel %vm656, %v621, -inf
    %658 = vmax.xlane.f32.xlu0 %v657
    %v659 = vpop.xlane.xlu0 %658
    %v660 = vsel %vm656, %v622, -inf
    %661 = vmax.xlane.f32.xlu0 %v660
    %v662 = vpop.xlane.xlu0 %661
    %v663 = vsel %vm656, %v623, -inf
    %664 = vmax.xlane.f32.xlu0 %v663
    %v665 = vpop.xlane.xlu0 %664
    %v666 = vsel %vm656, %v624, -inf
    %667 = vmax.xlane.f32.xlu0 %v666
    %v668 = vpop.xlane.xlu0 %667
    %v669 = vsel %vm656, %v625, -inf
    %670 = vmax.xlane.f32.xlu0 %v669
    %v671 = vpop.xlane.xlu0 %670
    %v672 = vsel %vm656, %v626, -inf
    %673 = vmax.xlane.f32.xlu0 %v672
    %v674 = vpop.xlane.xlu0 %673
    %v675 = vsel %vm656, %v627, -inf
    %676 = vmax.xlane.f32.xlu0 %v675
    %v677 = vpop.xlane.xlu0 %676
    %v678 = vsel %vm656, %v628, -inf
    %679 = vmax.xlane.f32.xlu0 %v678
    %v680 = vpop.xlane.xlu0 %679
    %v681 = vsel %vm656, %v629, -inf
    %682 = vmax.xlane.f32.xlu0 %v681
    %v683 = vpop.xlane.xlu0 %682
    %v684 = vsel %vm656, %v630, -inf
    %685 = vmax.xlane.f32.xlu0 %v684
    %v686 = vpop.xlane.xlu0 %685
    %v687 = vsel %vm656, %v631, -inf
    %688 = vmax.xlane.f32.xlu0 %v687
    %v689 = vpop.xlane.xlu0 %688
    %v690 = vsel %vm656, %v632, -inf
    %691 = vmax.xlane.f32.xlu0 %v690
    %v692 = vpop.xlane.xlu0 %691
    %v693 = vsel %vm656, %v633, -inf
    %694 = vmax.xlane.f32.xlu0 %v693
    %v695 = vpop.xlane.xlu0 %694
    %v696 = vsel %vm656, %v634, -inf
    %697 = vmax.xlane.f32.xlu0 %v696
    %v698 = vpop.xlane.xlu0 %697
    %v699 = vsel %vm656, %v635, -inf
    %700 = vmax.xlane.f32.xlu0 %v699
    %v701 = vpop.xlane.xlu0 %700
    %v702 = vsel %vm656, %v636, -inf
    %703 = vmax.xlane.f32.xlu0 %v702
    %v704 = vpop.xlane.xlu0 %703
    %v705 = vsel %vm656, %v637, -inf
    %706 = vmax.xlane.f32.xlu0 %v705
    %v707 = vpop.xlane.xlu0 %706
    %v708 = vsel %vm656, %v638, -inf
    %709 = vmax.xlane.f32.xlu0 %v708
    %v710 = vpop.xlane.xlu0 %709
    %v711 = vsel %vm656, %v639, -inf
    %712 = vmax.xlane.f32.xlu0 %v711
    %v713 = vpop.xlane.xlu0 %712
    %v714 = vsel %vm656, %v640, -inf
    %715 = vmax.xlane.f32.xlu0 %v714
    %v716 = vpop.xlane.xlu0 %715
    %v717 = vsel %vm656, %v641, -inf
    %718 = vmax.xlane.f32.xlu0 %v717
    %v719 = vpop.xlane.xlu0 %718
    %v720 = vsel %vm656, %v642, -inf
    %721 = vmax.xlane.f32.xlu0 %v720
    %v722 = vpop.xlane.xlu0 %721
    %v723 = vsel %vm656, %v643, -inf
    %724 = vmax.xlane.f32.xlu0 %v723
    %v725 = vpop.xlane.xlu0 %724
    %v726 = vsel %vm656, %v644, -inf
    %727 = vmax.xlane.f32.xlu0 %v726
    %v728 = vpop.xlane.xlu0 %727
    %v729 = vsel %vm656, %v645, -inf
    %730 = vmax.xlane.f32.xlu0 %v729
    %v731 = vpop.xlane.xlu0 %730
    %v732 = vsel %vm656, %v646, -inf
    %733 = vmax.xlane.f32.xlu0 %v732
    %v734 = vpop.xlane.xlu0 %733
    %v735 = vsel %vm656, %v647, -inf
    %736 = vmax.xlane.f32.xlu0 %v735
    %v737 = vpop.xlane.xlu0 %736
    %v738 = vsel %vm656, %v648, -inf
    %739 = vmax.xlane.f32.xlu0 %v738
    %v740 = vpop.xlane.xlu0 %739
    %v741 = vsel %vm656, %v649, -inf
    %742 = vmax.xlane.f32.xlu0 %v741
    %v743 = vpop.xlane.xlu0 %742
    %v744 = vsel %vm656, %v650, -inf
    %745 = vmax.xlane.f32.xlu0 %v744
    %v746 = vpop.xlane.xlu0 %745
    %v747 = vsel %vm656, %v651, -inf
    %748 = vmax.xlane.f32.xlu0 %v747
    %v749 = vpop.xlane.xlu0 %748
    %vm750 = vcmask 25600
    %v751 = vsel %vm750, %v652, -inf
    %752 = vmax.xlane.f32.xlu0 %v751
    %v753 = vpop.xlane.xlu0 %752
    %vm754 = vcmp.eq.f32.partialorder %v621, %v659
    %vm755 = vcmp.eq.f32.partialorder %v622, %v662
    %vm756 = vcmp.eq.f32.partialorder %v623, %v665
    %vm757 = vcmp.eq.f32.partialorder %v624, %v668
    %vm758 = vcmp.eq.f32.partialorder %v625, %v671
    %vm759 = vcmp.eq.f32.partialorder %v626, %v674
    %vm760 = vcmp.eq.f32.partialorder %v627, %v677
    %vm761 = vcmp.eq.f32.partialorder %v628, %v680
    %vm762 = vcmp.eq.f32.partialorder %v629, %v683
    %vm763 = vcmp.eq.f32.partialorder %v630, %v686
    %vm764 = vcmp.eq.f32.partialorder %v631, %v689
    %vm765 = vcmp.eq.f32.partialorder %v632, %v692
    %vm766 = vcmp.eq.f32.partialorder %v633, %v695
    %vm767 = vcmp.eq.f32.partialorder %v634, %v698
    %vm768 = vcmp.eq.f32.partialorder %v635, %v701
    %vm769 = vcmp.eq.f32.partialorder %v636, %v704
    %vm770 = vcmp.eq.f32.partialorder %v637, %v707
    %vm771 = vcmp.eq.f32.partialorder %v638, %v710
    %vm772 = vcmp.eq.f32.partialorder %v639, %v713
    %vm773 = vcmp.eq.f32.partialorder %v640, %v716
    %vm774 = vcmp.eq.f32.partialorder %v641, %v719
    %vm775 = vcmp.eq.f32.partialorder %v642, %v722
    %vm776 = vcmp.eq.f32.partialorder %v643, %v725
    %vm777 = vcmp.eq.f32.partialorder %v644, %v728
    %vm778 = vcmp.eq.f32.partialorder %v645, %v731
    %vm779 = vcmp.eq.f32.partialorder %v646, %v734
    %vm780 = vcmp.eq.f32.partialorder %v647, %v737
    %vm781 = vcmp.eq.f32.partialorder %v648, %v740
    %vm782 = vcmp.eq.f32.partialorder %v649, %v743
    %vm783 = vcmp.eq.f32.partialorder %v650, %v746
    %vm784 = vcmp.eq.f32.partialorder %v651, %v749
    %vm785 = vcmp.eq.f32.partialorder %v652, %v753
    %v786 = vsel %vm754, %v655, 4.0
    %v787 = vsel %vm755, %v655, 4.0
    %v788 = vsel %vm756, %v655, 4.0
    %v789 = vsel %vm757, %v655, 4.0
    %v790 = vsel %vm758, %v655, 4.0
    %v791 = vsel %vm759, %v655, 4.0
    %v792 = vsel %vm760, %v655, 4.0
    %v793 = vsel %vm761, %v655, 4.0
    %v794 = vsel %vm762, %v655, 4.0
    %v795 = vsel %vm763, %v655, 4.0
    %v796 = vsel %vm764, %v655, 4.0
    %v797 = vsel %vm765, %v655, 4.0
    %v798 = vsel %vm766, %v655, 4.0
    %v799 = vsel %vm767, %v655, 4.0
    %v800 = vsel %vm768, %v655, 4.0
    %v801 = vsel %vm769, %v655, 4.0
    %v802 = vsel %vm770, %v655, 4.0
    %v803 = vsel %vm771, %v655, 4.0
    %v804 = vsel %vm772, %v655, 4.0
    %v805 = vsel %vm773, %v655, 4.0
    %v806 = vsel %vm774, %v655, 4.0
    %v807 = vsel %vm775, %v655, 4.0
    %v808 = vsel %vm776, %v655, 4.0
    %v809 = vsel %vm777, %v655, 4.0
    %v810 = vsel %vm778, %v655, 4.0
    %v811 = vsel %vm779, %v655, 4.0
    %v812 = vsel %vm780, %v655, 4.0
    %v813 = vsel %vm781, %v655, 4.0
    %v814 = vsel %vm782, %v655, 4.0
    %v815 = vsel %vm783, %v655, 4.0
    %v816 = vsel %vm784, %v655, 4.0
    %v817 = vsel %vm785, %v655, 4.0
    %v818 = vsel %vm656, %v786, inf
    %819 = vmin.xlane.f32.xlu0 %v818
    %v820 = vpop.xlane.xlu0 %819
    %v821 = vsel %vm656, %v787, inf
    %822 = vmin.xlane.f32.xlu0 %v821
    %v823 = vpop.xlane.xlu0 %822
    %v824 = vsel %vm656, %v788, inf
    %825 = vmin.xlane.f32.xlu0 %v824
    %v826 = vpop.xlane.xlu0 %825
    %v827 = vsel %vm656, %v789, inf
    %828 = vmin.xlane.f32.xlu0 %v827
    %v829 = vpop.xlane.xlu0 %828
    %v830 = vsel %vm656, %v790, inf
    %831 = vmin.xlane.f32.xlu0 %v830
    %v832 = vpop.xlane.xlu0 %831
    %v833 = vsel %vm656, %v791, inf
    %834 = vmin.xlane.f32.xlu0 %v833
    %v835 = vpop.xlane.xlu0 %834
    %v836 = vsel %vm656, %v792, inf
    %837 = vmin.xlane.f32.xlu0 %v836
    %v838 = vpop.xlane.xlu0 %837
    %v839 = vsel %vm656, %v793, inf
    %840 = vmin.xlane.f32.xlu0 %v839
    %v841 = vpop.xlane.xlu0 %840
    %v842 = vsel %vm656, %v794, inf
    %843 = vmin.xlane.f32.xlu0 %v842
    %v844 = vpop.xlane.xlu0 %843
    %v845 = vsel %vm656, %v795, inf
    %846 = vmin.xlane.f32.xlu0 %v845
    %v847 = vpop.xlane.xlu0 %846
    %v848 = vsel %vm656, %v796, inf
    %849 = vmin.xlane.f32.xlu0 %v848
    %v850 = vpop.xlane.xlu0 %849
    %v851 = vsel %vm656, %v797, inf
    %852 = vmin.xlane.f32.xlu0 %v851
    %v853 = vpop.xlane.xlu0 %852
    %v854 = vsel %vm656, %v798, inf
    %855 = vmin.xlane.f32.xlu0 %v854
    %v856 = vpop.xlane.xlu0 %855
    %v857 = vsel %vm656, %v799, inf
    %858 = vmin.xlane.f32.xlu0 %v857
    %v859 = vpop.xlane.xlu0 %858
    %v860 = vsel %vm656, %v800, inf
    %861 = vmin.xlane.f32.xlu0 %v860
    %v862 = vpop.xlane.xlu0 %861
    %v863 = vsel %vm656, %v801, inf
    %864 = vmin.xlane.f32.xlu0 %v863
    %v865 = vpop.xlane.xlu0 %864
    %v866 = vsel %vm656, %v802, inf
    %867 = vmin.xlane.f32.xlu0 %v866
    %v868 = vpop.xlane.xlu0 %867
    %v869 = vsel %vm656, %v803, inf
    %870 = vmin.xlane.f32.xlu0 %v869
    %v871 = vpop.xlane.xlu0 %870
    %v872 = vsel %vm656, %v804, inf
    %873 = vmin.xlane.f32.xlu0 %v872
    %v874 = vpop.xlane.xlu0 %873
    %v875 = vsel %vm656, %v805, inf
    %876 = vmin.xlane.f32.xlu0 %v875
    %v877 = vpop.xlane.xlu0 %876
    %v878 = vsel %vm656, %v806, inf
    %879 = vmin.xlane.f32.xlu0 %v878
    %v880 = vpop.xlane.xlu0 %879
    %v881 = vsel %vm656, %v807, inf
    %882 = vmin.xlane.f32.xlu0 %v881
    %v883 = vpop.xlane.xlu0 %882
    %v884 = vsel %vm656, %v808, inf
    %885 = vmin.xlane.f32.xlu0 %v884
    %v886 = vpop.xlane.xlu0 %885
    %v887 = vsel %vm656, %v809, inf
    %888 = vmin.xlane.f32.xlu0 %v887
    %v889 = vpop.xlane.xlu0 %888
    %v890 = vsel %vm656, %v810, inf
    %891 = vmin.xlane.f32.xlu0 %v890
    %v892 = vpop.xlane.xlu0 %891
    %v893 = vsel %vm656, %v811, inf
    %894 = vmin.xlane.f32.xlu0 %v893
    %v895 = vpop.xlane.xlu0 %894
    %v896 = vsel %vm656, %v812, inf
    %897 = vmin.xlane.f32.xlu0 %v896
    %v898 = vpop.xlane.xlu0 %897
    %v899 = vsel %vm656, %v813, inf
    %900 = vmin.xlane.f32.xlu0 %v899
    %v901 = vpop.xlane.xlu0 %900
    %v902 = vsel %vm656, %v814, inf
    %903 = vmin.xlane.f32.xlu0 %v902
    %v904 = vpop.xlane.xlu0 %903
    %v905 = vsel %vm656, %v815, inf
    %906 = vmin.xlane.f32.xlu0 %v905
    %v907 = vpop.xlane.xlu0 %906
    %v908 = vsel %vm656, %v816, inf
    %909 = vmin.xlane.f32.xlu0 %v908
    %v910 = vpop.xlane.xlu0 %909
    %v911 = vsel %vm750, %v817, inf
    %912 = vmin.xlane.f32.xlu0 %v911
    %v913 = vpop.xlane.xlu0 %912
    %vm914 = vcmp.eq.f32.partialorder %v655, %v820
    %vm915 = vcmp.eq.f32.partialorder %v655, %v823
    %vm916 = vcmp.eq.f32.partialorder %v655, %v826
    %vm917 = vcmp.eq.f32.partialorder %v655, %v829
    %vm918 = vcmp.eq.f32.partialorder %v655, %v832
    %vm919 = vcmp.eq.f32.partialorder %v655, %v835
    %vm920 = vcmp.eq.f32.partialorder %v655, %v838
    %vm921 = vcmp.eq.f32.partialorder %v655, %v841
    %vm922 = vcmp.eq.f32.partialorder %v655, %v844
    %vm923 = vcmp.eq.f32.partialorder %v655, %v847
    %vm924 = vcmp.eq.f32.partialorder %v655, %v850
    %vm925 = vcmp.eq.f32.partialorder %v655, %v853
    %vm926 = vcmp.eq.f32.partialorder %v655, %v856
    %vm927 = vcmp.eq.f32.partialorder %v655, %v859
    %vm928 = vcmp.eq.f32.partialorder %v655, %v862
    %vm929 = vcmp.eq.f32.partialorder %v655, %v865
    %vm930 = vcmp.eq.f32.partialorder %v655, %v868
    %vm931 = vcmp.eq.f32.partialorder %v655, %v871
    %vm932 = vcmp.eq.f32.partialorder %v655, %v874
    %vm933 = vcmp.eq.f32.partialorder %v655, %v877
    %vm934 = vcmp.eq.f32.partialorder %v655, %v880
    %vm935 = vcmp.eq.f32.partialorder %v655, %v883
    %vm936 = vcmp.eq.f32.partialorder %v655, %v886
    %vm937 = vcmp.eq.f32.partialorder %v655, %v889
    %vm938 = vcmp.eq.f32.partialorder %v655, %v892
    %vm939 = vcmp.eq.f32.partialorder %v655, %v895
    %vm940 = vcmp.eq.f32.partialorder %v655, %v898
    %vm941 = vcmp.eq.f32.partialorder %v655, %v901
    %vm942 = vcmp.eq.f32.partialorder %v655, %v904
    %vm943 = vcmp.eq.f32.partialorder %v655, %v907
    %vm944 = vcmp.eq.f32.partialorder %v655, %v910
    %vm945 = vcmp.eq.f32.partialorder %v655, %v913
    %v946 = vsel %vm914, 1, 0
    %v947 = vsel %vm915, 1, 0
    %v948 = vsel %vm916, 1, 0
    %v949 = vsel %vm917, 1, 0
    %v950 = vsel %vm918, 1, 0
    %v951 = vsel %vm919, 1, 0
    %v952 = vsel %vm920, 1, 0
    %v953 = vsel %vm921, 1, 0
    %v954 = vsel %vm922, 1, 0
    %v955 = vsel %vm923, 1, 0
    %v956 = vsel %vm924, 1, 0
    %v957 = vsel %vm925, 1, 0
    %v958 = vsel %vm926, 1, 0
    %v959 = vsel %vm927, 1, 0
    %v960 = vsel %vm928, 1, 0
    %v961 = vsel %vm929, 1, 0
    %v962 = vsel %vm930, 1, 0
    %v963 = vsel %vm931, 1, 0
    %v964 = vsel %vm932, 1, 0
    %v965 = vsel %vm933, 1, 0
    %v966 = vsel %vm934, 1, 0
    %v967 = vsel %vm935, 1, 0
    %v968 = vsel %vm936, 1, 0
    %v969 = vsel %vm937, 1, 0
    %v970 = vsel %vm938, 1, 0
    %v971 = vsel %vm939, 1, 0
    %v972 = vsel %vm940, 1, 0
    %v973 = vsel %vm941, 1, 0
    %v974 = vsel %vm942, 1, 0
    %v975 = vsel %vm943, 1, 0
    %v976 = vsel %vm944, 1, 0
    %v977 = vsel %vm945, 1, 0
    %v978 = vcvt.s32.f32 %v946
    %v979 = vcvt.s32.f32 %v947
    %v980 = vcvt.s32.f32 %v948
    %v981 = vcvt.s32.f32 %v949
    %v982 = vcvt.s32.f32 %v950
    %v983 = vcvt.s32.f32 %v951
    %v984 = vcvt.s32.f32 %v952
    %v985 = vcvt.s32.f32 %v953
    %v986 = vcvt.s32.f32 %v954
    %v987 = vcvt.s32.f32 %v955
    %v988 = vcvt.s32.f32 %v956
    %v989 = vcvt.s32.f32 %v957
    %v990 = vcvt.s32.f32 %v958
    %v991 = vcvt.s32.f32 %v959
    %v992 = vcvt.s32.f32 %v960
    %v993 = vcvt.s32.f32 %v961
    %v994 = vcvt.s32.f32 %v962
    %v995 = vcvt.s32.f32 %v963
    %v996 = vcvt.s32.f32 %v964
    %v997 = vcvt.s32.f32 %v965
    %v998 = vcvt.s32.f32 %v966
    %v999 = vcvt.s32.f32 %v967
    %v1000 = vcvt.s32.f32 %v968
    %v1001 = vcvt.s32.f32 %v969
    %v1002 = vcvt.s32.f32 %v970
    %v1003 = vcvt.s32.f32 %v971
    %v1004 = vcvt.s32.f32 %v972
    %v1005 = vcvt.s32.f32 %v973
    %v1006 = vcvt.s32.f32 %v974
    %v1007 = vcvt.s32.f32 %v975
    %v1008 = vcvt.s32.f32 %v976
    %v1009 = vcvt.s32.f32 %v977
    %v1010 = vld [vmem:[%s7] sm:$0xf]
    %v1012 = vsel %vm656, %v978, 0
    %v1015 = vsel %vm656, %v979, 0
    %v1018 = vsel %vm656, %v980, 0
    %v1021 = vsel %vm656, %v981, 0
    %v1024 = vsel %vm656, %v982, 0
    %v1027 = vsel %vm656, %v983, 0
    %v1030 = vsel %vm656, %v984, 0
    %v1033 = vsel %vm656, %v985, 0
    %v1036 = vsel %vm656, %v986, 0
    %v1039 = vsel %vm656, %v987, 0
    %v1042 = vsel %vm656, %v988, 0
    %v1045 = vsel %vm656, %v989, 0
    %v1048 = vsel %vm656, %v990, 0
    %v1051 = vsel %vm656, %v991, 0
    %v1054 = vsel %vm656, %v992, 0
    %v1057 = vsel %vm656, %v993, 0
    %v1060 = vsel %vm656, %v994, 0
    %v1063 = vsel %vm656, %v995, 0
    %v1066 = vsel %vm656, %v996, 0
    %v1069 = vsel %vm656, %v997, 0
    %v1072 = vsel %vm656, %v998, 0
    %v1075 = vsel %vm656, %v999, 0
    %v1078 = vsel %vm656, %v1000, 0
    %v1081 = vsel %vm656, %v1001, 0
    %v1084 = vsel %vm656, %v1002, 0
    %v1087 = vsel %vm656, %v1003, 0
    %v1090 = vsel %vm656, %v1004, 0
    %v1093 = vsel %vm656, %v1005, 0
    %v1096 = vsel %vm656, %v1006, 0
    %v1099 = vsel %vm656, %v1007, 0
    %v1102 = vsel %vm656, %v1008, 0
    %v1105 = vsel %vm656, %v1009, 0
    %vm1107 = vcmask 1043456
    %v1109 = vsel %vm1107, %v1010, 0
    %1111 = vmatprep.subr.mxu0 0.0
    %1112 = vmatpush1.msra.mxu0 %v1109
    %1113 = vmatprep.subr.mxu0 0.0
    %1114 = vmatpush1.msra.mxu0 0.0
    %1115 = vmatprep.subr.mxu0 0.0
    %1116 = vmatpush1.msra.mxu0 0.0
    %1117 = vmatprep.subr.mxu0 0.0
    %1118 = vmatpush1.msra.mxu0 0.0
    %1119 = vmatprep.subr.mxu0 0.0
    %1120 = vmatpush1.msra.mxu0 0.0
    %1121 = vmatprep.subr.mxu0 0.0
    %1122 = vmatpush1.msra.mxu0 0.0
    %1123 = vmatprep.subr.mxu0 0.0
    %1124 = vmatpush1.msra.mxu0 0.0
    %1125 = vmatprep.subr.mxu0 0.0
    %1126 = vmatpush1.msra.mxu0 0.0
    %1127 = vmatprep.subr.mxu0 0.0
    %1128 = vmatpush1.msra.mxu0 0.0
    %1129 = vmatprep.subr.mxu0 0.0
    %1130 = vmatpush1.msra.mxu0 0.0
    %1131 = vmatprep.subr.mxu0 0.0
    %1132 = vmatpush1.msra.mxu0 0.0
    %1133 = vmatprep.subr.mxu0 0.0
    %1134 = vmatpush1.msra.mxu0 0.0
    %1135 = vmatprep.subr.mxu0 0.0
    %1136 = vmatpush1.msra.mxu0 0.0
    %1137 = vmatprep.subr.mxu0 0.0
    %1138 = vmatpush1.msra.mxu0 0.0
    %1139 = vmatprep.subr.mxu0 0.0
    %1140 = vmatpush1.msra.mxu0 0.0
    %1141 = vmatprep.subr.mxu0 0.0
    %1142 = vmatpush1.msra.mxu0 0.0
    %1143 = vmatprep.subr.mxu0 0.0
    %1144 = vmatpush1.msra.mxu0 0.0
    %1145 = vmatprep.subr.mxu0 0.0
    %1146 = vmatpush1.msra.mxu0 0.0
    %1147 = vmatprep.subr.mxu0 0.0
    %1148 = vmatpush1.msra.mxu0 0.0
    %1149 = vmatprep.subr.mxu0 0.0
    %1150 = vmatpush1.msra.mxu0 0.0
    %1151 = vmatprep.subr.mxu0 0.0
    %1152 = vmatpush1.msra.mxu0 0.0
    %1153 = vmatprep.subr.mxu0 0.0
    %1154 = vmatpush1.msra.mxu0 0.0
    %1155 = vmatprep.subr.mxu0 0.0
    %1156 = vmatpush1.msra.mxu0 0.0
    %1157 = vmatprep.subr.mxu0 0.0
    %1158 = vmatpush1.msra.mxu0 0.0
    %1159 = vmatprep.subr.mxu0 0.0
    %1160 = vmatpush1.msra.mxu0 0.0
    %1161 = vmatprep.subr.mxu0 0.0
    %1162 = vmatpush1.msra.mxu0 0.0
    %1163 = vmatprep.subr.mxu0 0.0
    %1164 = vmatpush1.msra.mxu0 0.0
    %1165 = vmatprep.subr.mxu0 0.0
    %1166 = vmatpush1.msra.mxu0 0.0
    %1167 = vmatprep.subr.mxu0 0.0
    %1168 = vmatpush1.msra.mxu0 0.0
    %1169 = vmatprep.subr.mxu0 0.0
    %1170 = vmatpush1.msra.mxu0 0.0
    %1171 = vmatprep.subr.mxu0 0.0
    %1172 = vmatpush1.msra.mxu0 0.0
    %1173 = vmatprep.subr.mxu0 0.0
    %1174 = vmatpush1.msra.mxu0 0.0
    %1175 = vmatprep.mubr.f32.mxu0 0.0
    %1176 = vmatmul.mubr.f32.gmra.mrb[0].mxu0 %v1012
    %v1177 = vpop.f32.mrb[0].mxu0
    %v1178 = vadd.f32 0.0, %v1177
    %v1179 = vpop.f32.mrb[0].mxu0
    %1180 = vmatprep.mubr.f32.mxu0 0.0
    %1181 = vmatmul.mubr.f32.gmra.mrb[0].mxu0 %v1015
    %v1182 = vpop.f32.mrb[0].mxu0
    %v1183 = vadd.f32 0.0, %v1182
    %v1184 = vpop.f32.mrb[0].mxu0
    %1185 = vmatprep.mubr.f32.mxu0 0.0
    %1186 = vmatmul.mubr.f32.gmra.mrb[0].mxu0 %v1018
    %v1187 = vpop.f32.mrb[0].mxu0
    %v1188 = vadd.f32 0.0, %v1187
    %v1189 = vpop.f32.mrb[0].mxu0
    %1190 = vmatprep.mubr.f32.mxu0 0.0
    %1191 = vmatmul.mubr.f32.gmra.mrb[0].mxu0 %v1021
    %v1192 = vpop.f32.mrb[0].mxu0
    %v1193 = vadd.f32 0.0, %v1192
    %v1194 = vpop.f32.mrb[0].mxu0
    %1195 = vmatprep.mubr.f32.mxu0 0.0
    %1196 = vmatmul.mubr.f32.gmra.mrb[0].mxu0 %v1024
    %v1197 = vpop.f32.mrb[0].mxu0
    %v1198 = vadd.f32 0.0, %v1197
    %v1199 = vpop.f32.mrb[0].mxu0
    %1200 = vmatprep.mubr.f32.mxu0 0.0
    %1201 = vmatmul.mubr.f32.gmra.mrb[0].mxu0 %v1027
    %v1202 = vpop.f32.mrb[0].mxu0
    %v1203 = vadd.f32 0.0, %v1202
    %v1204 = vpop.f32.mrb[0].mxu0
    %1205 = vmatprep.mubr.f32.mxu0 0.0
    %1206 = vmatmul.mubr.f32.gmra.mrb[0].mxu0 %v1030
    %v1207 = vpop.f32.mrb[0].mxu0
    %v1208 = vadd.f32 0.0, %v1207
    %v1209 = vpop.f32.mrb[0].mxu0
    %1210 = vmatprep.mubr.f32.mxu0 0.0
    %1211 = vmatmul.mubr.f32.gmra.mrb[0].mxu0 %v1033
    %v1212 = vpop.f32.mrb[0].mxu0
    %v1213 = vadd.f32 0.0, %v1212
    %v1214 = vpop.f32.mrb[0].mxu0
    %1215 = vmatprep.mubr.f32.mxu0 0.0
    %1216 = vmatmul.mubr.f32.gmra.mrb[0].mxu0 %v1036
    %v1217 = vpop.f32.mrb[0].mxu0
    %v1218 = vadd.f32 0.0, %v1217
    %v1219 = vpop.f32.mrb[0].mxu0
    %1220 = vmatprep.mubr.f32.mxu0 0.0
    %1221 = vmatmul.mubr.f32.gmra.mrb[0].mxu0 %v1039
    %v1222 = vpop.f32.mrb[0].mxu0
    %v1223 = vadd.f32 0.0, %v1222
    %v1224 = vpop.f32.mrb[0].mxu0
    %1225 = vmatprep.mubr.f32.mxu0 0.0
    %1226 = vmatmul.mubr.f32.gmra.mrb[0].mxu0 %v1042
    %v1227 = vpop.f32.mrb[0].mxu0
    %v1228 = vadd.f32 0.0, %v1227
    %v1229 = vpop.f32.mrb[0].mxu0
    %1230 = vmatprep.mubr.f32.mxu0 0.0
    %1231 = vmatmul.mubr.f32.gmra.mrb[0].mxu0 %v1045
    %v1232 = vpop.f32.mrb[0].mxu0
    %v1233 = vadd.f32 0.0, %v1232
    %v1234 = vpop.f32.mrb[0].mxu0
    %1235 = vmatprep.mubr.f32.mxu0 0.0
    %1236 = vmatmul.mubr.f32.gmra.mrb[0].mxu0 %v1048
    %v1237 = vpop.f32.mrb[0].mxu0
    %v1238 = vadd.f32 0.0, %v1237
    %v1239 = vpop.f32.mrb[0].mxu0
    %1240 = vmatprep.mubr.f32.mxu0 0.0
    %1241 = vmatmul.mubr.f32.gmra.mrb[0].mxu0 %v1051
    %v1242 = vpop.f32.mrb[0].mxu0
    %v1243 = vadd.f32 0.0, %v1242
    %v1244 = vpop.f32.mrb[0].mxu0
    %1245 = vmatprep.mubr.f32.mxu0 0.0
    %1246 = vmatmul.mubr.f32.gmra.mrb[0].mxu0 %v1054
    %v1247 = vpop.f32.mrb[0].mxu0
    %v1248 = vadd.f32 0.0, %v1247
    %v1249 = vpop.f32.mrb[0].mxu0
    %1250 = vmatprep.mubr.f32.mxu0 0.0
    %1251 = vmatmul.mubr.f32.gmra.mrb[0].mxu0 %v1057
    %v1252 = vpop.f32.mrb[0].mxu0
    %v1253 = vadd.f32 0.0, %v1252
    %v1254 = vpop.f32.mrb[0].mxu0
    %1255 = vmatprep.mubr.f32.mxu0 0.0
    %1256 = vmatmul.mubr.f32.gmra.mrb[0].mxu0 %v1060
    %v1257 = vpop.f32.mrb[0].mxu0
    %v1258 = vadd.f32 0.0, %v1257
    %v1259 = vpop.f32.mrb[0].mxu0
    %1260 = vmatprep.mubr.f32.mxu0 0.0
    %1261 = vmatmul.mubr.f32.gmra.mrb[0].mxu0 %v1063
    %v1262 = vpop.f32.mrb[0].mxu0
    %v1263 = vadd.f32 0.0, %v1262
    %v1264 = vpop.f32.mrb[0].mxu0
    %1265 = vmatprep.mubr.f32.mxu0 0.0
    %1266 = vmatmul.mubr.f32.gmra.mrb[0].mxu0 %v1066
    %v1267 = vpop.f32.mrb[0].mxu0
    %v1268 = vadd.f32 0.0, %v1267
    %v1269 = vpop.f32.mrb[0].mxu0
    %1270 = vmatprep.mubr.f32.mxu0 0.0
    %1271 = vmatmul.mubr.f32.gmra.mrb[0].mxu0 %v1069
    %v1272 = vpop.f32.mrb[0].mxu0
    %v1273 = vadd.f32 0.0, %v1272
    %v1274 = vpop.f32.mrb[0].mxu0
    %1275 = vmatprep.mubr.f32.mxu0 0.0
    %1276 = vmatmul.mubr.f32.gmra.mrb[0].mxu0 %v1072
    %v1277 = vpop.f32.mrb[0].mxu0
    %v1278 = vadd.f32 0.0, %v1277
    %v1279 = vpop.f32.mrb[0].mxu0
    %1280 = vmatprep.mubr.f32.mxu0 0.0
    %1281 = vmatmul.mubr.f32.gmra.mrb[0].mxu0 %v1075
    %v1282 = vpop.f32.mrb[0].mxu0
    %v1283 = vadd.f32 0.0, %v1282
    %v1284 = vpop.f32.mrb[0].mxu0
    %1285 = vmatprep.mubr.f32.mxu0 0.0
    %1286 = vmatmul.mubr.f32.gmra.mrb[0].mxu0 %v1078
    %v1287 = vpop.f32.mrb[0].mxu0
    %v1288 = vadd.f32 0.0, %v1287
    %v1289 = vpop.f32.mrb[0].mxu0
    %1290 = vmatprep.mubr.f32.mxu0 0.0
    %1291 = vmatmul.mubr.f32.gmra.mrb[0].mxu0 %v1081
    %v1292 = vpop.f32.mrb[0].mxu0
    %v1293 = vadd.f32 0.0, %v1292
    %v1294 = vpop.f32.mrb[0].mxu0
    %1295 = vmatprep.mubr.f32.mxu0 0.0
    %1296 = vmatmul.mubr.f32.gmra.mrb[0].mxu0 %v1084
    %v1297 = vpop.f32.mrb[0].mxu0
    %v1298 = vadd.f32 0.0, %v1297
    %v1299 = vpop.f32.mrb[0].mxu0
    %1300 = vmatprep.mubr.f32.mxu0 0.0
    %1301 = vmatmul.mubr.f32.gmra.mrb[0].mxu0 %v1087
    %v1302 = vpop.f32.mrb[0].mxu0
    %v1303 = vadd.f32 0.0, %v1302
    %v1304 = vpop.f32.mrb[0].mxu0
    %1305 = vmatprep.mubr.f32.mxu0 0.0
    %1306 = vmatmul.mubr.f32.gmra.mrb[0].mxu0 %v1090
    %v1307 = vpop.f32.mrb[0].mxu0
    %v1308 = vadd.f32 0.0, %v1307
    %v1309 = vpop.f32.mrb[0].mxu0
    %1310 = vmatprep.mubr.f32.mxu0 0.0
    %1311 = vmatmul.mubr.f32.gmra.mrb[0].mxu0 %v1093
    %v1312 = vpop.f32.mrb[0].mxu0
    %v1313 = vadd.f32 0.0, %v1312
    %v1314 = vpop.f32.mrb[0].mxu0
    %1315 = vmatprep.mubr.f32.mxu0 0.0
    %1316 = vmatmul.mubr.f32.gmra.mrb[0].mxu0 %v1096
    %v1317 = vpop.f32.mrb[0].mxu0
    %v1318 = vadd.f32 0.0, %v1317
    %v1319 = vpop.f32.mrb[0].mxu0
    %1320 = vmatprep.mubr.f32.mxu0 0.0
    %1321 = vmatmul.mubr.f32.gmra.mrb[0].mxu0 %v1099
    %v1322 = vpop.f32.mrb[0].mxu0
    %v1323 = vadd.f32 0.0, %v1322
    %v1324 = vpop.f32.mrb[0].mxu0
    %1325 = vmatprep.mubr.f32.mxu0 0.0
    %1326 = vmatmul.mubr.f32.gmra.mrb[0].mxu0 %v1102
    %v1327 = vpop.f32.mrb[0].mxu0
    %v1328 = vadd.f32 0.0, %v1327
    %v1329 = vpop.f32.mrb[0].mxu0
    %1330 = vmatprep.mubr.f32.mxu0 0.0
    %1331 = vmatmul.mubr.f32.gmra.mrb[0].mxu0 %v1105
    %v1332 = vpop.f32.mrb[0].mxu0
    %v1333 = vadd.f32 0.0, %v1332
    %v1334 = vpop.f32.mrb[0].mxu0
    %1335 = vdwg.mxu0
    %v1336 = vld [vmem:[%s6] sm:$0x1]
    %v1338 = vlaneseq
    %v1339 = vshrl.u32 %v1338, 7
    %v1340 = vsub.s32 0, %v1339
    %v1341 = vrot.slane %v1336, %v1340
    %v1343 = vadd.f32 %v1341, %v1178
    %v1344 = vadd.f32 %v1341, %v1183
    %v1345 = vadd.f32 %v1341, %v1188
    %v1346 = vadd.f32 %v1341, %v1193
    %v1347 = vadd.f32 %v1341, %v1198
    %v1348 = vadd.f32 %v1341, %v1203
    %v1349 = vadd.f32 %v1341, %v1208
    %v1350 = vadd.f32 %v1341, %v1213
    %v1351 = vadd.f32 %v1341, %v1218
    %v1352 = vadd.f32 %v1341, %v1223
    %v1353 = vadd.f32 %v1341, %v1228
    %v1354 = vadd.f32 %v1341, %v1233
    %v1355 = vadd.f32 %v1341, %v1238
    %v1356 = vadd.f32 %v1341, %v1243
    %v1357 = vadd.f32 %v1341, %v1248
    %v1358 = vadd.f32 %v1341, %v1253
    %v1359 = vadd.f32 %v1341, %v1258
    %v1360 = vadd.f32 %v1341, %v1263
    %v1361 = vadd.f32 %v1341, %v1268
    %v1362 = vadd.f32 %v1341, %v1273
    %v1363 = vadd.f32 %v1341, %v1278
    %v1364 = vadd.f32 %v1341, %v1283
    %v1365 = vadd.f32 %v1341, %v1288
    %v1366 = vadd.f32 %v1341, %v1293
    %v1367 = vadd.f32 %v1341, %v1298
    %v1368 = vadd.f32 %v1341, %v1303
    %v1369 = vadd.f32 %v1341, %v1308
    %v1370 = vadd.f32 %v1341, %v1313
    %v1371 = vadd.f32 %v1341, %v1318
    %v1372 = vadd.f32 %v1341, %v1323
    %v1373 = vadd.f32 %v1341, %v1328
    %v1374 = vadd.f32 %v1341, %v1333
    %v1375 = vmul.f32 %v589, %v1343
    %v1376 = vmul.f32 %v590, %v1344
    %v1377 = vmul.f32 %v591, %v1345
    %v1378 = vmul.f32 %v592, %v1346
    %v1379 = vmul.f32 %v593, %v1347
    %v1380 = vmul.f32 %v594, %v1348
    %v1381 = vmul.f32 %v595, %v1349
    %v1382 = vmul.f32 %v596, %v1350
    %v1383 = vmul.f32 %v597, %v1351
    %v1384 = vmul.f32 %v598, %v1352
    %v1385 = vmul.f32 %v599, %v1353
    %v1386 = vmul.f32 %v600, %v1354
    %v1387 = vmul.f32 %v601, %v1355
    %v1388 = vmul.f32 %v602, %v1356
    %v1389 = vmul.f32 %v603, %v1357
    %v1390 = vmul.f32 %v604, %v1358
    %v1391 = vmul.f32 %v605, %v1359
    %v1392 = vmul.f32 %v606, %v1360
    %v1393 = vmul.f32 %v607, %v1361
    %v1394 = vmul.f32 %v608, %v1362
    %v1395 = vmul.f32 %v609, %v1363
    %v1396 = vmul.f32 %v610, %v1364
    %v1397 = vmul.f32 %v611, %v1365
    %v1398 = vmul.f32 %v612, %v1366
    %v1399 = vmul.f32 %v613, %v1367
    %v1400 = vmul.f32 %v614, %v1368
    %v1401 = vmul.f32 %v615, %v1369
    %v1402 = vmul.f32 %v616, %v1370
    %v1403 = vmul.f32 %v617, %v1371
    %v1404 = vmul.f32 %v618, %v1372
    %v1405 = vmul.f32 %v619, %v1373
    %v1406 = vmul.f32 %v620, %v1374
    %s1407 = sld [smem:[#allocation2]]
    %v1408 = vstv %s1407
    %v1410 = vsel %vm379, 1.0, 0
    %v1413 = vsel %vm379, %v1375, 0
    %v1416 = vsel %vm379, %v1376, 0
    %v1419 = vsel %vm379, %v1377, 0
    %v1422 = vsel %vm379, %v1378, 0
    %v1425 = vsel %vm379, %v1379, 0
    %v1428 = vsel %vm379, %v1380, 0
    %v1431 = vsel %vm379, %v1381, 0
    %v1434 = vsel %vm379, %v1382, 0
    %v1437 = vsel %vm379, %v1383, 0
    %v1440 = vsel %vm379, %v1384, 0
    %v1443 = vsel %vm379, %v1385, 0
    %v1446 = vsel %vm379, %v1386, 0
    %v1449 = vsel %vm379, %v1387, 0
    %v1452 = vsel %vm379, %v1388, 0
    %v1455 = vsel %vm379, %v1389, 0
    %v1458 = vsel %vm379, %v1390, 0
    %v1461 = vsel %vm379, %v1391, 0
    %v1464 = vsel %vm379, %v1392, 0
    %v1467 = vsel %vm379, %v1393, 0
    %v1470 = vsel %vm379, %v1394, 0
    %v1473 = vsel %vm379, %v1395, 0
    %v1476 = vsel %vm379, %v1396, 0
    %v1479 = vsel %vm379, %v1397, 0
    %v1482 = vsel %vm379, %v1398, 0
    %v1485 = vsel %vm379, %v1399, 0
    %v1488 = vsel %vm379, %v1400, 0
    %v1491 = vsel %vm379, %v1401, 0
    %v1494 = vsel %vm379, %v1402, 0
    %v1497 = vsel %vm379, %v1403, 0
    %v1500 = vsel %vm379, %v1404, 0
    %v1503 = vsel %vm379, %v1405, 0
    %v1506 = vsel %vm379, %v1406, 0
    %1508 = vmatprep.subr.mxu0 0.0
    %1509 = vmatpush1.xpose.msra.mxu0 %v1413
    %1510 = vmatprep.subr.mxu0 0.0
    %1511 = vmatpush1.xpose.msra.mxu0 %v1416
    %1512 = vmatprep.subr.mxu0 0.0
    %1513 = vmatpush1.xpose.msra.mxu0 %v1419
    %1514 = vmatprep.subr.mxu0 0.0
    %1515 = vmatpush1.xpose.msra.mxu0 %v1422
    %1516 = vmatprep.subr.mxu0 0.0
    %1517 = vmatpush1.xpose.msra.mxu0 %v1425
    %1518 = vmatprep.subr.mxu0 0.0
    %1519 = vmatpush1.xpose.msra.mxu0 %v1428
    %1520 = vmatprep.subr.mxu0 0.0
    %1521 = vmatpush1.xpose.msra.mxu0 %v1431
    %1522 = vmatprep.subr.mxu0 0.0
    %1523 = vmatpush1.xpose.msra.mxu0 %v1434
    %1524 = vmatprep.subr.mxu0 0.0
    %1525 = vmatpush1.xpose.msra.mxu0 %v1437
    %1526 = vmatprep.subr.mxu0 0.0
    %1527 = vmatpush1.xpose.msra.mxu0 %v1440
    %1528 = vmatprep.subr.mxu0 0.0
    %1529 = vmatpush1.xpose.msra.mxu0 %v1443
    %1530 = vmatprep.subr.mxu0 0.0
    %1531 = vmatpush1.xpose.msra.mxu0 %v1446
    %1532 = vmatprep.subr.mxu0 0.0
    %1533 = vmatpush1.xpose.msra.mxu0 %v1449
    %1534 = vmatprep.subr.mxu0 0.0
    %1535 = vmatpush1.xpose.msra.mxu0 %v1452
    %1536 = vmatprep.subr.mxu0 0.0
    %1537 = vmatpush1.xpose.msra.mxu0 %v1455
    %1538 = vmatprep.subr.mxu0 0.0
    %1539 = vmatpush1.xpose.msra.mxu0 %v1458
    %1540 = vmatprep.subr.mxu0 0.0
    %1541 = vmatpush1.xpose.msra.mxu0 %v1461
    %1542 = vmatprep.subr.mxu0 0.0
    %1543 = vmatpush1.xpose.msra.mxu0 %v1464
    %1544 = vmatprep.subr.mxu0 0.0
    %1545 = vmatpush1.xpose.msra.mxu0 %v1467
    %1546 = vmatprep.subr.mxu0 0.0
    %1547 = vmatpush1.xpose.msra.mxu0 %v1470
    %1548 = vmatprep.subr.mxu0 0.0
    %1549 = vmatpush1.xpose.msra.mxu0 %v1473
    %1550 = vmatprep.subr.mxu0 0.0
    %1551 = vmatpush1.xpose.msra.mxu0 %v1476
    %1552 = vmatprep.subr.mxu0 0.0
    %1553 = vmatpush1.xpose.msra.mxu0 %v1479
    %1554 = vmatprep.subr.mxu0 0.0
    %1555 = vmatpush1.xpose.msra.mxu0 %v1482
    %1556 = vmatprep.subr.mxu0 0.0
    %1557 = vmatpush1.xpose.msra.mxu0 %v1485
    %1558 = vmatprep.subr.mxu0 0.0
    %1559 = vmatpush1.xpose.msra.mxu0 %v1488
    %1560 = vmatprep.subr.mxu0 0.0
    %1561 = vmatpush1.xpose.msra.mxu0 %v1491
    %1562 = vmatprep.subr.mxu0 0.0
    %1563 = vmatpush1.xpose.msra.mxu0 %v1494
    %1564 = vmatprep.subr.mxu0 0.0
    %1565 = vmatpush1.xpose.msra.mxu0 %v1497
    %1566 = vmatprep.subr.mxu0 0.0
    %1567 = vmatpush1.xpose.msra.mxu0 %v1500
    %1568 = vmatprep.subr.mxu0 0.0
    %1569 = vmatpush1.xpose.msra.mxu0 %v1503
    %1570 = vmatprep.subr.mxu0 0.0
    %1571 = vmatpush1.xpose.msra.mxu0 %v1506
    %1572 = vmatprep.mubr.f32.mxu0 0.0
    %1573 = vmatmul.mubr.f32.gmra.mrb[0].mxu0 %v1410
    %v1574 = vpop.f32.mrb[0].mxu0
    %v1575 = vadd.f32 %v1408, %v1574
    %v1576 = vpop.f32.mrb[0].mxu0
    %v1577 = vadd.f32 %v1408, %v1576
    %1578 = vdwg.mxu0
    %v1581 = vcombine.low %v1575, %v1577
    %v1583 = vunpack.c.l.s4 1966171168
    %v1584 = vunpack.c.0.s8 %v1583
    %v1585 = vlaneseq
    %v1586 = vshrl.u32 %v1585, 7
    %v1587 = vsub.s32 %v1584, %v1586
    %v1588 = vrot.slane %v1581, %v1587
    %v1590 = vunpack.c.l.s4 1966171168
    %v1591 = vunpack.c.0.s8 %v1590
    %v1592 = vlaneseq
    %v1593 = vshrl.u32 %v1592, 7
    %v1594 = vsub.s32 %v1591, %v1593
    %v1595 = vrot.slane %v1588, %v1594
    %v1597 = vlaneseq
    %vm1598 = vcmp.ge.s32.totalorder %v1597, 0
    %vm1599 = vcmp.lt.s32.totalorder %v1597, 250
    %vm1600 = vmand %vm1598, %vm1599
    %1601 = vst.msk [vmem:[#allocation3] sm:$0x3] %vm1600, %v1595
    // Predicated region
    $region38: #{tpu_custom_call.1} parent=1 // pred_check
      _
    $region39: #{tpu_custom_call.1} parent=1 // pred_check_branch
      %1603 = sbr.rel (0) target = $region41
    $region40: #{tpu_custom_call.1} parent=1 // pred_region
      %s1605 = ssub.s32 32, 32
      %1606 = vsyncadd [#allocation4], %s1605
      %s1608 = sshll.u32 [#allocation3], 4
      %s1609 = int_to_ptr.vmem [resolvable:$true] %s1608
      %1611 = dma.vmem_to_hbm [thread:$0]  %s1609, 32, %s9, [#allocation4]
    $region41: #{tpu_custom_call.1} parent=1 // pred_fallthru
      _
    // Predicated region
    $region42: #{tpu_custom_call.1} parent=1 // pred_check
      _
    $region43: #{tpu_custom_call.1} parent=1 // pred_check_branch
      %1613 = sbr.rel (0) target = $region45
    $region44: #{tpu_custom_call.1} parent=1 // pred_region
      %1614 = dma.done [#allocation4], 32
    $region45: #{tpu_custom_call.1} parent=1 // pred_fallthru
      _
    %1615 = vsyncpa [#allocation4], 1

</llo_original>
